<compile_context>
chip_gen: v7x
topology: tpu7x:2x2x1
jax: 0.10.0
libtpu: 0.0.40
codegen_flags: <defaults>
</compile_context>

<pallas_src>
import functools

import jax
import jax.numpy as jnp
from jax.experimental import pallas as pl
from jax.experimental.pallas import tpu as pltpu


def _round_up(x: int, m: int) -> int:
    return ((x + m - 1) // m) * m


def _loss_kernel(est_ref, truth_ref, sum_ref, min_ref, max_ref, *, tm, n_rows):
    # Elementwise hot path (VPU + one EUP cos per element). cos is even, so
    # the abs() from the PyTorch module is mathematically redundant.
    d = truth_ref[...] - est_ref[...]
    if d.dtype != jnp.float32:
        d = d.astype(jnp.float32)
    dist = 1.0 - jnp.cos((2.0 * jnp.pi) * d)          # (tm, 2500)

    if n_rows % tm != 0:
        # Mask rows past the true end of the array (last, partial tile).
        row = (jax.lax.broadcasted_iota(jnp.int32, (tm, 1), 0)
               + pl.program_id(0) * tm)
        valid = row < n_rows
        dist_sum = jnp.where(valid, dist, 0.0)
        dist_min = jnp.where(valid, dist, jnp.inf)
        dist_max = jnp.where(valid, dist, -jnp.inf)
    else:
        dist_sum = dist_min = dist_max = dist

    # Fold the row axis once per tile -> lane-dense (1, 2500) partials.
    sum_ref[...] = dist_sum.sum(axis=0, keepdims=True).reshape(sum_ref.shape)
    min_ref[...] = dist_min.min(axis=0, keepdims=True).reshape(min_ref.shape)
    max_ref[...] = dist_max.max(axis=0, keepdims=True).reshape(max_ref.shape)


def custom_loss(est: jax.Array, truth: jax.Array, *, tm: int = 256):
    """Returns (Loss, Distance_min, Distance_max) as float32 scalars."""
    assert est.shape == truth.shape and est.ndim == 2
    n_rows, d = est.shape

    tm = min(tm, _round_up(n_rows, 8))          # keep tiny inputs tiny
    grid = pl.cdiv(n_rows, tm)
    n_elems = n_rows * d

    kernel = functools.partial(_loss_kernel, tm=tm, n_rows=n_rows)

    in_spec = pl.BlockSpec((tm, d), lambda i: (i, 0))
    out_spec = pl.BlockSpec((1, 1, d), lambda i: (i, 0, 0))
    part_shape = jax.ShapeDtypeStruct((grid, 1, d), jnp.float32)

    psum, pmin, pmax = pl.pallas_call(
        kernel,
        out_shape=(part_shape, part_shape, part_shape),
        grid=(grid,),
        in_specs=[in_spec, in_spec],
        out_specs=(out_spec, out_spec, out_spec),
        compiler_params=pltpu.CompilerParams(
            dimension_semantics=("parallel",)),
        cost_estimate=pl.CostEstimate(
            flops=4 * n_elems,
            transcendentals=n_elems,
            bytes_accessed=8 * n_elems + 3 * 4 * grid * d),
    )(est, truth)

    loss = jnp.sum(psum) / jnp.float32(n_elems)
    return loss, jnp.min(pmin), jnp.max(pmax)


if __name__ == "__main__":
    # Small deterministic inputs; trailing dim must be 2500 per the module.
    N, D = 2, 2500
    key = jax.random.PRNGKey(0)
    k_est, k_truth = jax.random.split(key)
    est = jax.random.uniform(k_est, (N, D), dtype=jnp.float32)
    truth = jax.random.uniform(k_truth, (N, D), dtype=jnp.float32)

    loss, dmin, dmax = custom_loss(est, truth)
    jax.block_until_ready((loss, dmin, dmax))

    # Pure-JAX reference check (same math as the PyTorch module).
    dist_ref = 1.0 - jnp.cos(2.0 * jnp.pi * jnp.abs(truth - est))
    assert jnp.allclose(loss, jnp.mean(dist_ref), atol=1e-5)
    assert jnp.allclose(dmin, jnp.min(dist_ref), atol=1e-5)
    assert jnp.allclose(dmax, jnp.max(dist_ref), atol=1e-5)

    print("KERNEL_OK")
</pallas_src>

<mosaic_0001>
module attributes {stable_mosaic.version = 11 : i64} {
  func.func @_loss_kernel(%arg0: i32, %arg1: memref<8x2500xf32, #tpu.memory_space<vmem>>, %arg2: memref<8x2500xf32, #tpu.memory_space<vmem>>, %arg3: memref<1x1x2500xf32, #tpu.memory_space<vmem>>, %arg4: memref<1x1x2500xf32, #tpu.memory_space<vmem>>, %arg5: memref<1x1x2500xf32, #tpu.memory_space<vmem>>) attributes {dimension_semantics = [#tpu.dimension_semantics<parallel>], iteration_bounds = array<i64: 1>, scalar_prefetch = 0 : i64, scratch_operands = 0 : i64, tpu.core_type = #tpu.core_type<tc>, window_params = [{transform_indices = @transform_0, window_bounds = array<i64: 8, 2500>}, {transform_indices = @transform_1, window_bounds = array<i64: 8, 2500>}, {transform_indices = @transform_2, window_bounds = array<i64: 1, 1, 2500>}, {transform_indices = @transform_3, window_bounds = array<i64: 1, 1, 2500>}, {transform_indices = @transform_4, window_bounds = array<i64: 1, 1, 2500>}]} {
    %c0 = arith.constant 0 : index
    %c0_0 = arith.constant 0 : index
    %0 = vector.load %arg2[%c0, %c0_0] : memref<8x2500xf32, #tpu.memory_space<vmem>>, vector<8x2500xf32>
    %c0_1 = arith.constant 0 : index
    %c0_2 = arith.constant 0 : index
    %1 = vector.load %arg1[%c0_1, %c0_2] : memref<8x2500xf32, #tpu.memory_space<vmem>>, vector<8x2500xf32>
    %2 = arith.subf %0, %1 : vector<8x2500xf32>
    %cst = arith.constant 6.28318548 : f32
    %3 = vector.broadcast %cst : f32 to vector<8x2500xf32>
    %4 = arith.mulf %3, %2 : vector<8x2500xf32>
    %5 = math.cos %4 : vector<8x2500xf32>
    %cst_3 = arith.constant 1.000000e+00 : f32
    %6 = vector.broadcast %cst_3 : f32 to vector<8x2500xf32>
    %7 = arith.subf %6, %5 : vector<8x2500xf32>
    %8 = tpu.iota {dimensions = array<i32: 0>} : vector<8x1xi32>
    %c8_i32 = arith.constant 8 : i32
    %9 = arith.muli %arg0, %c8_i32 : i32
    %10 = vector.broadcast %9 : i32 to vector<8x1xi32>
    %11 = arith.addi %8, %10 : vector<8x1xi32>
    %c2_i32 = arith.constant 2 : i32
    %12 = vector.broadcast %c2_i32 : i32 to vector<8x1xi32>
    %13 = arith.cmpi slt, %11, %12 : vector<8x1xi32>
    %cst_4 = arith.constant 0.000000e+00 : f32
    %14 = vector.shape_cast %13 : vector<8x1xi1> to vector<8x1xi1>
    %15 = vector.broadcast %14 : vector<8x1xi1> to vector<8x2500xi1>
    %16 = vector.broadcast %cst_4 : f32 to vector<8x2500xf32>
    %17 = arith.select %15, %7, %16 : vector<8x2500xi1>, vector<8x2500xf32>
    %cst_5 = arith.constant 0x7F800000 : f32
    %18 = vector.shape_cast %13 : vector<8x1xi1> to vector<8x1xi1>
    %19 = vector.broadcast %18 : vector<8x1xi1> to vector<8x2500xi1>
    %20 = vector.broadcast %cst_5 : f32 to vector<8x2500xf32>
    %21 = arith.select %19, %7, %20 : vector<8x2500xi1>, vector<8x2500xf32>
    %cst_6 = arith.constant 0xFF800000 : f32
    %22 = vector.shape_cast %13 : vector<8x1xi1> to vector<8x1xi1>
    %23 = vector.broadcast %22 : vector<8x1xi1> to vector<8x2500xi1>
    %24 = vector.broadcast %cst_6 : f32 to vector<8x2500xf32>
    %25 = arith.select %23, %7, %24 : vector<8x2500xi1>, vector<8x2500xf32>
    %cst_7 = arith.constant dense<0.000000e+00> : vector<2500xf32>
    %26 = vector.multi_reduction <add>, %17, %cst_7 [0] : vector<8x2500xf32> to vector<2500xf32>
    %27 = vector.shape_cast %26 : vector<2500xf32> to vector<1x2500xf32>
    %28 = vector.shape_cast %27 : vector<1x2500xf32> to vector<1x1x2500xf32>
    %c0_8 = arith.constant 0 : index
    %c0_9 = arith.constant 0 : index
    %c0_10 = arith.constant 0 : index
    %29 = vector.load %arg3[%c0_8, %c0_9, %c0_10] : memref<1x1x2500xf32, #tpu.memory_space<vmem>>, vector<1x1x2500xf32>
    tpu.vector_store %arg3[%c0_8, %c0_9, %c0_10], %28 {strides = array<i32>} : memref<1x1x2500xf32, #tpu.memory_space<vmem>>, vector<1x1x2500xf32>,
    %cst_11 = arith.constant dense<0x7F800000> : vector<2500xf32>
    %30 = vector.multi_reduction <minimumf>, %21, %cst_11 [0] : vector<8x2500xf32> to vector<2500xf32>
    %31 = vector.shape_cast %30 : vector<2500xf32> to vector<1x2500xf32>
    %32 = vector.shape_cast %31 : vector<1x2500xf32> to vector<1x1x2500xf32>
    %c0_12 = arith.constant 0 : index
    %c0_13 = arith.constant 0 : index
    %c0_14 = arith.constant 0 : index
    %33 = vector.load %arg4[%c0_12, %c0_13, %c0_14] : memref<1x1x2500xf32, #tpu.memory_space<vmem>>, vector<1x1x2500xf32>
    tpu.vector_store %arg4[%c0_12, %c0_13, %c0_14], %32 {strides = array<i32>} : memref<1x1x2500xf32, #tpu.memory_space<vmem>>, vector<1x1x2500xf32>,
    %cst_15 = arith.constant dense<0xFF800000> : vector<2500xf32>
    %34 = vector.multi_reduction <maximumf>, %25, %cst_15 [0] : vector<8x2500xf32> to vector<2500xf32>
    %35 = vector.shape_cast %34 : vector<2500xf32> to vector<1x2500xf32>
    %36 = vector.shape_cast %35 : vector<1x2500xf32> to vector<1x1x2500xf32>
    %c0_16 = arith.constant 0 : index
    %c0_17 = arith.constant 0 : index
    %c0_18 = arith.constant 0 : index
    %37 = vector.load %arg5[%c0_16, %c0_17, %c0_18] : memref<1x1x2500xf32, #tpu.memory_space<vmem>>, vector<1x1x2500xf32>
    tpu.vector_store %arg5[%c0_16, %c0_17, %c0_18], %36 {strides = array<i32>} : memref<1x1x2500xf32, #tpu.memory_space<vmem>>, vector<1x1x2500xf32>,
    return
  }
  func.func @transform_0(%arg0: i32) -> (i32, i32) {
    %c0_i32 = arith.constant 0 : i32
    %c0_i32_0 = arith.constant 0 : i32
    return %arg0, %c0_i32 : i32, i32
  }
  func.func @transform_1(%arg0: i32) -> (i32, i32) {
    %c0_i32 = arith.constant 0 : i32
    %c0_i32_0 = arith.constant 0 : i32
    return %arg0, %c0_i32 : i32, i32
  }
  func.func @transform_2(%arg0: i32) -> (i32, i32, i32) {
    %c0_i32 = arith.constant 0 : i32
    %c0_i32_0 = arith.constant 0 : i32
    %c0_i32_1 = arith.constant 0 : i32
    return %arg0, %c0_i32, %c0_i32_0 : i32, i32, i32
  }
  func.func @transform_3(%arg0: i32) -> (i32, i32, i32) {
    %c0_i32 = arith.constant 0 : i32
    %c0_i32_0 = arith.constant 0 : i32
    %c0_i32_1 = arith.constant 0 : i32
    return %arg0, %c0_i32, %c0_i32_0 : i32, i32, i32
  }
  func.func @transform_4(%arg0: i32) -> (i32, i32, i32) {
    %c0_i32 = arith.constant 0 : i32
    %c0_i32_0 = arith.constant 0 : i32
    %c0_i32_1 = arith.constant 0 : i32
    return %arg0, %c0_i32, %c0_i32_0 : i32, i32, i32
  }
}

</mosaic_0001>

<llo_original>
// kernel: tpu_custom_call.1
$region0: #{tpu_custom_call.1}
  #allocation0 [shape = 'u32[]', space=smem, size = 0x4, offset = 0x4, fixed_abs, tag = 'smem constant byte address 0x4 - core index']
  #allocation1 [shape = 'u32[144,128]{1,0:T(1,128)}', space=vmem, size = 0x12000, scoped, tag = 'internal scratch']
  %s0 = inlined_call_operand.hbm [shape: f32[2,2500], index: 0, kind: input, shape index: {}]
  %s1 = inlined_call_operand.hbm [shape: f32[2,2500], index: 1, kind: input, shape index: {}]
  %s2 = inlined_call_operand.hbm [shape: f32[1,1,2500], index: 2, kind: output, shape index: {0}]
  %s3 = inlined_call_operand.hbm [shape: f32[1,1,2500], index: 3, kind: output, shape index: {1}]
  %s4 = inlined_call_operand.hbm [shape: f32[1,1,2500], index: 4, kind: output, shape index: {2}]
  %5 = xla_tuple %s2, %s3, %s4
  %s6 = sld [smem:[#allocation0]]
  $region42: #{tpu_custom_call.1} parent=0
    _
  %s8 = ssub.s32 1, %s6
  %s9 = scalar_select 0, %s8, %s6
  $region1: #{tpu_custom_call.1} parent=0
    #allocation2 [shape = 'u8[81920]{0}', space=vmem, size = 0x14000, scoped, tag = 'input window, operand 0, single buffered']
    #allocation3 [shape = 's32[1]{0}', space=sflag, size = 0x4, scoped, tag = 'scoped memory for tpu_custom_call.1']
    #allocation4 [shape = 's32[1]{0}', space=sflag, size = 0x4, scoped, tag = 'scoped memory for tpu_custom_call.1']
    #allocation5 [shape = 'u8[81920]{0}', space=vmem, size = 0x14000, scoped, tag = 'input window, operand 1, single buffered']
    #allocation6 [shape = 's32[1]{0}', space=sflag, size = 0x4, scoped, tag = 'scoped memory for tpu_custom_call.1']
    #allocation7 [shape = 'u8[10240]{0}', space=vmem, size = 0x2800, scoped, tag = 'output window, operand 0, single buffered']
    #allocation8 [shape = 'u8[10240]{0}', space=vmem, size = 0x2800, scoped, tag = 'output window, operand 1, single buffered']
    #allocation9 [shape = 's32[1]{0}', space=sflag, size = 0x4, scoped, tag = 'scoped memory for tpu_custom_call.1']
    #allocation10 [shape = 'u8[10240]{0}', space=vmem, size = 0x2800, scoped, tag = 'output window, operand 2, single buffered']
    %10 = vsyncpa [#allocation3], 0
    %11 = vsyncpa [#allocation6], 0
    %12 = vsyncpa [#allocation4], 0
    %13 = vsyncpa [#allocation9], 0
    // Predicated region
    $region2: #{tpu_custom_call.1} parent=1 // pred_check
      _
    $region3: #{tpu_custom_call.1} parent=1 // pred_check_branch
      %15 = sbr.rel (0) target = $region5
    $region4: #{tpu_custom_call.1} parent=1 // pred_region
      %s17 = ssub.s32 2560, 640
      %18 = vsyncadd [#allocation3], %s17
      %s19 = sshll.u32 [#allocation2], 4
      %s20 = int_to_ptr.vmem [resolvable:$true] %s19
      %25 = dma.hbm_to_vmem [thread:$0]  %s0, 640, %s20, [#allocation3], 640, 640, 40
    $region5: #{tpu_custom_call.1} parent=1 // pred_fallthru
      _
    // Predicated region
    $region6: #{tpu_custom_call.1} parent=1 // pred_check
      _
    $region7: #{tpu_custom_call.1} parent=1 // pred_check_branch
      %27 = sbr.rel (0) target = $region9
    $region8: #{tpu_custom_call.1} parent=1 // pred_region
      %s29 = ssub.s32 2560, 640
      %30 = vsyncadd [#allocation6], %s29
      %s31 = sshll.u32 [#allocation5], 4
      %s32 = int_to_ptr.vmem [resolvable:$true] %s31
      %37 = dma.hbm_to_vmem [thread:$0]  %s1, 640, %s32, [#allocation6], 640, 640, 40
    $region9: #{tpu_custom_call.1} parent=1 // pred_fallthru
      _
    // Predicated region
    $region10: #{tpu_custom_call.1} parent=1 // pred_check
      _
    $region11: #{tpu_custom_call.1} parent=1 // pred_check_branch
      %39 = sbr.rel (0) target = $region13
    $region12: #{tpu_custom_call.1} parent=1 // pred_region
      %40 = dma.done [#allocation3], 2560
    $region13: #{tpu_custom_call.1} parent=1 // pred_fallthru
      _
    // Predicated region
    $region14: #{tpu_custom_call.1} parent=1 // pred_check
      _
    $region15: #{tpu_custom_call.1} parent=1 // pred_check_branch
      %42 = sbr.rel (0) target = $region17
    $region16: #{tpu_custom_call.1} parent=1 // pred_region
      %43 = dma.done [#allocation6], 2560
    $region17: #{tpu_custom_call.1} parent=1 // pred_fallthru
      _
    %v44 = vld [vmem:[#allocation5] sm:$0xff]
    %v45 = vld [vmem:[#allocation5 + $0x8] sm:$0xff]
    %v46 = vld [vmem:[#allocation5 + $0x10] sm:$0xff]
    %v47 = vld [vmem:[#allocation5 + $0x18] sm:$0xff]
    %v48 = vld [vmem:[#allocation5 + $0x20] sm:$0xff]
    %v49 = vld [vmem:[#allocation5 + $0x28] sm:$0xff]
    %v50 = vld [vmem:[#allocation5 + $0x30] sm:$0xff]
    %v51 = vld [vmem:[#allocation5 + $0x38] sm:$0xff]
    %v52 = vld [vmem:[#allocation5 + $0x40] sm:$0xff]
    %v53 = vld [vmem:[#allocation5 + $0x48] sm:$0xff]
    %v54 = vld [vmem:[#allocation5 + $0x50] sm:$0xff]
    %v55 = vld [vmem:[#allocation5 + $0x58] sm:$0xff]
    %v56 = vld [vmem:[#allocation5 + $0x60] sm:$0xff]
    %v57 = vld [vmem:[#allocation5 + $0x68] sm:$0xff]
    %v58 = vld [vmem:[#allocation5 + $0x70] sm:$0xff]
    %v59 = vld [vmem:[#allocation5 + $0x78] sm:$0xff]
    %v60 = vld [vmem:[#allocation5 + $0x80] sm:$0xff]
    %v61 = vld [vmem:[#allocation5 + $0x88] sm:$0xff]
    %v62 = vld [vmem:[#allocation5 + $0x90] sm:$0xff]
    %v63 = vld [vmem:[#allocation5 + $0x98] sm:$0xff]
    %v64 = vld [vmem:[#allocation2] sm:$0xff]
    %v65 = vld [vmem:[#allocation2 + $0x8] sm:$0xff]
    %v66 = vld [vmem:[#allocation2 + $0x10] sm:$0xff]
    %v67 = vld [vmem:[#allocation2 + $0x18] sm:$0xff]
    %v68 = vld [vmem:[#allocation2 + $0x20] sm:$0xff]
    %v69 = vld [vmem:[#allocation2 + $0x28] sm:$0xff]
    %v70 = vld [vmem:[#allocation2 + $0x30] sm:$0xff]
    %v71 = vld [vmem:[#allocation2 + $0x38] sm:$0xff]
    %v72 = vld [vmem:[#allocation2 + $0x40] sm:$0xff]
    %v73 = vld [vmem:[#allocation2 + $0x48] sm:$0xff]
    %v74 = vld [vmem:[#allocation2 + $0x50] sm:$0xff]
    %v75 = vld [vmem:[#allocation2 + $0x58] sm:$0xff]
    %v76 = vld [vmem:[#allocation2 + $0x60] sm:$0xff]
    %v77 = vld [vmem:[#allocation2 + $0x68] sm:$0xff]
    %v78 = vld [vmem:[#allocation2 + $0x70] sm:$0xff]
    %v79 = vld [vmem:[#allocation2 + $0x78] sm:$0xff]
    %v80 = vld [vmem:[#allocation2 + $0x80] sm:$0xff]
    %v81 = vld [vmem:[#allocation2 + $0x88] sm:$0xff]
    %v82 = vld [vmem:[#allocation2 + $0x90] sm:$0xff]
    %v83 = vld [vmem:[#allocation2 + $0x98] sm:$0xff]
    %v84 = vsub.f32 %v44, %v64
    %v85 = vsub.f32 %v45, %v65
    %v86 = vsub.f32 %v46, %v66
    %v87 = vsub.f32 %v47, %v67
    %v88 = vsub.f32 %v48, %v68
    %v89 = vsub.f32 %v49, %v69
    %v90 = vsub.f32 %v50, %v70
    %v91 = vsub.f32 %v51, %v71
    %v92 = vsub.f32 %v52, %v72
    %v93 = vsub.f32 %v53, %v73
    %v94 = vsub.f32 %v54, %v74
    %v95 = vsub.f32 %v55, %v75
    %v96 = vsub.f32 %v56, %v76
    %v97 = vsub.f32 %v57, %v77
    %v98 = vsub.f32 %v58, %v78
    %v99 = vsub.f32 %v59, %v79
    %v100 = vsub.f32 %v60, %v80
    %v101 = vsub.f32 %v61, %v81
    %v102 = vsub.f32 %v62, %v82
    %v103 = vsub.f32 %v63, %v83
    %v104 = vmul.f32 %v84, 6.2831855
    %v105 = vmul.f32 %v85, 6.2831855
    %v106 = vmul.f32 %v86, 6.2831855
    %v107 = vmul.f32 %v87, 6.2831855
    %v108 = vmul.f32 %v88, 6.2831855
    %v109 = vmul.f32 %v89, 6.2831855
    %v110 = vmul.f32 %v90, 6.2831855
    %v111 = vmul.f32 %v91, 6.2831855
    %v112 = vmul.f32 %v92, 6.2831855
    %v113 = vmul.f32 %v93, 6.2831855
    %v114 = vmul.f32 %v94, 6.2831855
    %v115 = vmul.f32 %v95, 6.2831855
    %v116 = vmul.f32 %v96, 6.2831855
    %v117 = vmul.f32 %v97, 6.2831855
    %v118 = vmul.f32 %v98, 6.2831855
    %v119 = vmul.f32 %v99, 6.2831855
    %v120 = vmul.f32 %v100, 6.2831855
    %v121 = vmul.f32 %v101, 6.2831855
    %v122 = vmul.f32 %v102, 6.2831855
    %v123 = vmul.f32 %v103, 6.2831855
    %v124 = vand.u32 2147483647, %v104
    %vm125 = vcmp.le.f32.partialorder %v124, 0.7853982
    %vm126 = vcmp.lt.s32.totalorder %v104, 0
    %v127 = vand.u32 %v104, 2139095040
    %v128 = vshrl.u32 %v127, 23
    %v129 = vsub.s32 %v128, 127
    %v130 = vand.u32 2147483647, %v104
    %v131 = vand.u32 %v130, 8388607
    %v132 = vor.u32 %v131, 8388608
    %v133 = vsub.s32 0, %v132
    %v134 = vadd.s32 %v129, 1
    %vm135 = vcmp.gt.s32.totalorder %v134, 0
    %v136 = vsel %vm135, %v134, 0
    %v137 = vshrl.u32 %v136, 5
    %v138 = vand.u32 %v136, 31
    %v139 = vsub.s32 32, %v138
    %v140 = vshrl.u32 683565275, %v139
    %v141 = vshll.u32 683565275, %v138
    %v142 = vshrl.u32 2475754826, %v139
    %v143 = vor.u32 %v141, %v142
    %v144 = vshll.u32 2475754826, %v138
    %v145 = vshrl.u32 2131351028, %v139
    %v146 = vor.u32 %v144, %v145
    %v147 = vshll.u32 2131351028, %v138
    %v148 = vshrl.u32 2102212464, %v139
    %v149 = vor.u32 %v147, %v148
    %v150 = vshll.u32 2102212464, %v138
    %v151 = vshrl.u32 920167782, %v139
    %v152 = vor.u32 %v150, %v151
    %v153 = vshll.u32 920167782, %v138
    %v154 = vshrl.u32 1326507024, %v139
    %v155 = vor.u32 %v153, %v154
    %vm156 = vcmp.lt.s32.totalorder %v137, 1
    %vm157 = vcmp.lt.s32.totalorder %v137, 2
    %vm158 = vcmp.lt.s32.totalorder %v137, 3
    %vm159 = vcmp.lt.s32.totalorder %v137, 4
    %v160 = vsel %vm156, %v140, %v143
    %v161 = vsel %vm159, %v149, 2102212464
    %v162 = vsel %vm158, %v146, %v161
    %v163 = vsel %vm157, %v160, %v162
    %v164 = vsel %vm156, %v143, %v146
    %v165 = vsel %vm159, %v152, 920167782
    %v166 = vsel %vm158, %v149, %v165
    %v167 = vsel %vm157, %v164, %v166
    %v168 = vsel %vm156, %v146, %v149
    %v169 = vsel %vm159, %v155, 1326507024
    %v170 = vsel %vm158, %v152, %v169
    %v171 = vsel %vm157, %v168, %v170
    %v172 = vshll.u32 %v132, 8
    %v173 = vmul.u32.u64.compose %v172, %v171
    %v174 = vextract.low.u32 %v173
    %v175 = vextract.high.u32 %v173
    %v176 = vmul.u32.u64.compose %v172, %v167
    %v177 = vextract.low.u32 %v176
    %v178 = vextract.high.u32 %v176
    %v179 = vmul.u32 %v172, %v163
    %v180 = vadd.s32 %v175, %v177
    %vm181 = vc.u32 %v175, %v177
    %v182 = vadd.s32 %v178, 1
    %v183 = vsel %vm181, %v182, %v178
    %v184 = vadd.s32 %v179, %v183
    %v185 = vadd.s32 %v184, 536870912
    %v186 = vshrl.u32 %v185, 30
    %v187 = vshll.u32 %v186, 30
    %v188 = vsub.s32 %v184, %v187
    %vm189 = vcmp.lt.s32.totalorder %v188, 0
    %v190 = vsub.s32 0, %v188
    %v191 = vsel %vm189, %v190, %v188
    %v192 = vclz %v191
    %v193 = vsub.s32 %v192, 2
    %vm194 = vcmp.gt.s32.totalorder 0, %v193
    %v195 = vsel %vm194, 0, %v193
    %v196 = vsub.s32 32, %v195
    %v197 = vshll.u32 %v188, %v195
    %v198 = vshrl.u32 %v180, %v196
    %v199 = vor.u32 %v197, %v198
    %v200 = vsub.s32 4294967266, %v195
    %v201 = vadd.s32 %v200, 127
    %v202 = vshll.u32 %v201, 23
    %v203 = vor.u32 4788187, %v202
    %v204 = vand.u32 2147483647, %v203
    %v206 = vcvt.s32.f32 %v199
    %v207 = vmul.f32 %v206, %v204
    %v208 = vxor.u32 %v207, 2147483648
    %v209 = vsel %vm126, %v208, %v207
    %v210 = vsub.s32 4, %v186
    %v211 = vsel %vm126, %v210, %v186
    %v212 = vsel %vm125, %v104, %v209
    %v213 = vsel %vm125, 0, %v211
    %v214 = vcosq.f32.pop %v212
    %v215 = vsinq.f32.pop %v212
    %vm216 = vweird.f32 %v104
    %v217 = vand.u32 %v213, 3
    %vm218 = vcmp.lt.s32.totalorder %v217, 2
    %vm219 = vcmp.eq.s32.totalorder %v217, 0
    %v220 = vxor.u32 %v215, 2147483648
    %v221 = vsel %vm219, %v214, %v220
    %vm222 = vcmp.eq.s32.totalorder %v217, 2
    %v223 = vxor.u32 %v214, 2147483648
    %v224 = vsel %vm222, %v223, %v215
    %v225 = vsel %vm218, %v221, %v224
    %v226 = vsel %vm216, nan, %v225
    %v227 = vand.u32 2147483647, %v105
    %vm228 = vcmp.le.f32.partialorder %v227, 0.7853982
    %vm229 = vcmp.lt.s32.totalorder %v105, 0
    %v230 = vand.u32 %v105, 2139095040
    %v231 = vshrl.u32 %v230, 23
    %v232 = vsub.s32 %v231, 127
    %v233 = vand.u32 2147483647, %v105
    %v234 = vand.u32 %v233, 8388607
    %v235 = vor.u32 %v234, 8388608
    %v236 = vsub.s32 0, %v235
    %v237 = vadd.s32 %v232, 1
    %vm238 = vcmp.gt.s32.totalorder %v237, 0
    %v239 = vsel %vm238, %v237, 0
    %v240 = vshrl.u32 %v239, 5
    %v241 = vand.u32 %v239, 31
    %v242 = vsub.s32 32, %v241
    %v243 = vshrl.u32 683565275, %v242
    %v244 = vshll.u32 683565275, %v241
    %v245 = vshrl.u32 2475754826, %v242
    %v246 = vor.u32 %v244, %v245
    %v247 = vshll.u32 2475754826, %v241
    %v248 = vshrl.u32 2131351028, %v242
    %v249 = vor.u32 %v247, %v248
    %v250 = vshll.u32 2131351028, %v241
    %v251 = vshrl.u32 2102212464, %v242
    %v252 = vor.u32 %v250, %v251
    %v253 = vshll.u32 2102212464, %v241
    %v254 = vshrl.u32 920167782, %v242
    %v255 = vor.u32 %v253, %v254
    %v256 = vshll.u32 920167782, %v241
    %v257 = vshrl.u32 1326507024, %v242
    %v258 = vor.u32 %v256, %v257
    %vm259 = vcmp.lt.s32.totalorder %v240, 1
    %vm260 = vcmp.lt.s32.totalorder %v240, 2
    %vm261 = vcmp.lt.s32.totalorder %v240, 3
    %vm262 = vcmp.lt.s32.totalorder %v240, 4
    %v263 = vsel %vm259, %v243, %v246
    %v264 = vsel %vm262, %v252, 2102212464
    %v265 = vsel %vm261, %v249, %v264
    %v266 = vsel %vm260, %v263, %v265
    %v267 = vsel %vm259, %v246, %v249
    %v268 = vsel %vm262, %v255, 920167782
    %v269 = vsel %vm261, %v252, %v268
    %v270 = vsel %vm260, %v267, %v269
    %v271 = vsel %vm259, %v249, %v252
    %v272 = vsel %vm262, %v258, 1326507024
    %v273 = vsel %vm261, %v255, %v272
    %v274 = vsel %vm260, %v271, %v273
    %v275 = vshll.u32 %v235, 8
    %v276 = vmul.u32.u64.compose %v275, %v274
    %v277 = vextract.low.u32 %v276
    %v278 = vextract.high.u32 %v276
    %v279 = vmul.u32.u64.compose %v275, %v270
    %v280 = vextract.low.u32 %v279
    %v281 = vextract.high.u32 %v279
    %v282 = vmul.u32 %v275, %v266
    %v283 = vadd.s32 %v278, %v280
    %vm284 = vc.u32 %v278, %v280
    %v285 = vadd.s32 %v281, 1
    %v286 = vsel %vm284, %v285, %v281
    %v287 = vadd.s32 %v282, %v286
    %v288 = vadd.s32 %v287, 536870912
    %v289 = vshrl.u32 %v288, 30
    %v290 = vshll.u32 %v289, 30
    %v291 = vsub.s32 %v287, %v290
    %vm292 = vcmp.lt.s32.totalorder %v291, 0
    %v293 = vsub.s32 0, %v291
    %v294 = vsel %vm292, %v293, %v291
    %v295 = vclz %v294
    %v296 = vsub.s32 %v295, 2
    %vm297 = vcmp.gt.s32.totalorder 0, %v296
    %v298 = vsel %vm297, 0, %v296
    %v299 = vsub.s32 32, %v298
    %v300 = vshll.u32 %v291, %v298
    %v301 = vshrl.u32 %v283, %v299
    %v302 = vor.u32 %v300, %v301
    %v303 = vsub.s32 4294967266, %v298
    %v304 = vadd.s32 %v303, 127
    %v305 = vshll.u32 %v304, 23
    %v306 = vor.u32 4788187, %v305
    %v307 = vand.u32 2147483647, %v306
    %v309 = vcvt.s32.f32 %v302
    %v310 = vmul.f32 %v309, %v307
    %v311 = vxor.u32 %v310, 2147483648
    %v312 = vsel %vm229, %v311, %v310
    %v313 = vsub.s32 4, %v289
    %v314 = vsel %vm229, %v313, %v289
    %v315 = vsel %vm228, %v105, %v312
    %v316 = vsel %vm228, 0, %v314
    %v317 = vcosq.f32.pop %v315
    %v318 = vsinq.f32.pop %v315
    %vm319 = vweird.f32 %v105
    %v320 = vand.u32 %v316, 3
    %vm321 = vcmp.lt.s32.totalorder %v320, 2
    %vm322 = vcmp.eq.s32.totalorder %v320, 0
    %v323 = vxor.u32 %v318, 2147483648
    %v324 = vsel %vm322, %v317, %v323
    %vm325 = vcmp.eq.s32.totalorder %v320, 2
    %v326 = vxor.u32 %v317, 2147483648
    %v327 = vsel %vm325, %v326, %v318
    %v328 = vsel %vm321, %v324, %v327
    %v329 = vsel %vm319, nan, %v328
    %v330 = vand.u32 2147483647, %v106
    %vm331 = vcmp.le.f32.partialorder %v330, 0.7853982
    %vm332 = vcmp.lt.s32.totalorder %v106, 0
    %v333 = vand.u32 %v106, 2139095040
    %v334 = vshrl.u32 %v333, 23
    %v335 = vsub.s32 %v334, 127
    %v336 = vand.u32 2147483647, %v106
    %v337 = vand.u32 %v336, 8388607
    %v338 = vor.u32 %v337, 8388608
    %v339 = vsub.s32 0, %v338
    %v340 = vadd.s32 %v335, 1
    %vm341 = vcmp.gt.s32.totalorder %v340, 0
    %v342 = vsel %vm341, %v340, 0
    %v343 = vshrl.u32 %v342, 5
    %v344 = vand.u32 %v342, 31
    %v345 = vsub.s32 32, %v344
    %v346 = vshrl.u32 683565275, %v345
    %v347 = vshll.u32 683565275, %v344
    %v348 = vshrl.u32 2475754826, %v345
    %v349 = vor.u32 %v347, %v348
    %v350 = vshll.u32 2475754826, %v344
    %v351 = vshrl.u32 2131351028, %v345
    %v352 = vor.u32 %v350, %v351
    %v353 = vshll.u32 2131351028, %v344
    %v354 = vshrl.u32 2102212464, %v345
    %v355 = vor.u32 %v353, %v354
    %v356 = vshll.u32 2102212464, %v344
    %v357 = vshrl.u32 920167782, %v345
    %v358 = vor.u32 %v356, %v357
    %v359 = vshll.u32 920167782, %v344
    %v360 = vshrl.u32 1326507024, %v345
    %v361 = vor.u32 %v359, %v360
    %vm362 = vcmp.lt.s32.totalorder %v343, 1
    %vm363 = vcmp.lt.s32.totalorder %v343, 2
    %vm364 = vcmp.lt.s32.totalorder %v343, 3
    %vm365 = vcmp.lt.s32.totalorder %v343, 4
    %v366 = vsel %vm362, %v346, %v349
    %v367 = vsel %vm365, %v355, 2102212464
    %v368 = vsel %vm364, %v352, %v367
    %v369 = vsel %vm363, %v366, %v368
    %v370 = vsel %vm362, %v349, %v352
    %v371 = vsel %vm365, %v358, 920167782
    %v372 = vsel %vm364, %v355, %v371
    %v373 = vsel %vm363, %v370, %v372
    %v374 = vsel %vm362, %v352, %v355
    %v375 = vsel %vm365, %v361, 1326507024
    %v376 = vsel %vm364, %v358, %v375
    %v377 = vsel %vm363, %v374, %v376
    %v378 = vshll.u32 %v338, 8
    %v379 = vmul.u32.u64.compose %v378, %v377
    %v380 = vextract.low.u32 %v379
    %v381 = vextract.high.u32 %v379
    %v382 = vmul.u32.u64.compose %v378, %v373
    %v383 = vextract.low.u32 %v382
    %v384 = vextract.high.u32 %v382
    %v385 = vmul.u32 %v378, %v369
    %v386 = vadd.s32 %v381, %v383
    %vm387 = vc.u32 %v381, %v383
    %v388 = vadd.s32 %v384, 1
    %v389 = vsel %vm387, %v388, %v384
    %v390 = vadd.s32 %v385, %v389
    %v391 = vadd.s32 %v390, 536870912
    %v392 = vshrl.u32 %v391, 30
    %v393 = vshll.u32 %v392, 30
    %v394 = vsub.s32 %v390, %v393
    %vm395 = vcmp.lt.s32.totalorder %v394, 0
    %v396 = vsub.s32 0, %v394
    %v397 = vsel %vm395, %v396, %v394
    %v398 = vclz %v397
    %v399 = vsub.s32 %v398, 2
    %vm400 = vcmp.gt.s32.totalorder 0, %v399
    %v401 = vsel %vm400, 0, %v399
    %v402 = vsub.s32 32, %v401
    %v403 = vshll.u32 %v394, %v401
    %v404 = vshrl.u32 %v386, %v402
    %v405 = vor.u32 %v403, %v404
    %v406 = vsub.s32 4294967266, %v401
    %v407 = vadd.s32 %v406, 127
    %v408 = vshll.u32 %v407, 23
    %v409 = vor.u32 4788187, %v408
    %v410 = vand.u32 2147483647, %v409
    %v412 = vcvt.s32.f32 %v405
    %v413 = vmul.f32 %v412, %v410
    %v414 = vxor.u32 %v413, 2147483648
    %v415 = vsel %vm332, %v414, %v413
    %v416 = vsub.s32 4, %v392
    %v417 = vsel %vm332, %v416, %v392
    %v418 = vsel %vm331, %v106, %v415
    %v419 = vsel %vm331, 0, %v417
    %v420 = vcosq.f32.pop %v418
    %v421 = vsinq.f32.pop %v418
    %vm422 = vweird.f32 %v106
    %v423 = vand.u32 %v419, 3
    %vm424 = vcmp.lt.s32.totalorder %v423, 2
    %vm425 = vcmp.eq.s32.totalorder %v423, 0
    %v426 = vxor.u32 %v421, 2147483648
    %v427 = vsel %vm425, %v420, %v426
    %vm428 = vcmp.eq.s32.totalorder %v423, 2
    %v429 = vxor.u32 %v420, 2147483648
    %v430 = vsel %vm428, %v429, %v421
    %v431 = vsel %vm424, %v427, %v430
    %v432 = vsel %vm422, nan, %v431
    %v433 = vand.u32 2147483647, %v107
    %vm434 = vcmp.le.f32.partialorder %v433, 0.7853982
    %vm435 = vcmp.lt.s32.totalorder %v107, 0
    %v436 = vand.u32 %v107, 2139095040
    %v437 = vshrl.u32 %v436, 23
    %v438 = vsub.s32 %v437, 127
    %v439 = vand.u32 2147483647, %v107
    %v440 = vand.u32 %v439, 8388607
    %v441 = vor.u32 %v440, 8388608
    %v442 = vsub.s32 0, %v441
    %v443 = vadd.s32 %v438, 1
    %vm444 = vcmp.gt.s32.totalorder %v443, 0
    %v445 = vsel %vm444, %v443, 0
    %v446 = vshrl.u32 %v445, 5
    %v447 = vand.u32 %v445, 31
    %v448 = vsub.s32 32, %v447
    %v449 = vshrl.u32 683565275, %v448
    %v450 = vshll.u32 683565275, %v447
    %v451 = vshrl.u32 2475754826, %v448
    %v452 = vor.u32 %v450, %v451
    %v453 = vshll.u32 2475754826, %v447
    %v454 = vshrl.u32 2131351028, %v448
    %v455 = vor.u32 %v453, %v454
    %v456 = vshll.u32 2131351028, %v447
    %v457 = vshrl.u32 2102212464, %v448
    %v458 = vor.u32 %v456, %v457
    %v459 = vshll.u32 2102212464, %v447
    %v460 = vshrl.u32 920167782, %v448
    %v461 = vor.u32 %v459, %v460
    %v462 = vshll.u32 920167782, %v447
    %v463 = vshrl.u32 1326507024, %v448
    %v464 = vor.u32 %v462, %v463
    %vm465 = vcmp.lt.s32.totalorder %v446, 1
    %vm466 = vcmp.lt.s32.totalorder %v446, 2
    %vm467 = vcmp.lt.s32.totalorder %v446, 3
    %vm468 = vcmp.lt.s32.totalorder %v446, 4
    %v469 = vsel %vm465, %v449, %v452
    %v470 = vsel %vm468, %v458, 2102212464
    %v471 = vsel %vm467, %v455, %v470
    %v472 = vsel %vm466, %v469, %v471
    %v473 = vsel %vm465, %v452, %v455
    %v474 = vsel %vm468, %v461, 920167782
    %v475 = vsel %vm467, %v458, %v474
    %v476 = vsel %vm466, %v473, %v475
    %v477 = vsel %vm465, %v455, %v458
    %v478 = vsel %vm468, %v464, 1326507024
    %v479 = vsel %vm467, %v461, %v478
    %v480 = vsel %vm466, %v477, %v479
    %v481 = vshll.u32 %v441, 8
    %v482 = vmul.u32.u64.compose %v481, %v480
    %v483 = vextract.low.u32 %v482
    %v484 = vextract.high.u32 %v482
    %v485 = vmul.u32.u64.compose %v481, %v476
    %v486 = vextract.low.u32 %v485
    %v487 = vextract.high.u32 %v485
    %v488 = vmul.u32 %v481, %v472
    %v489 = vadd.s32 %v484, %v486
    %vm490 = vc.u32 %v484, %v486
    %v491 = vadd.s32 %v487, 1
    %v492 = vsel %vm490, %v491, %v487
    %v493 = vadd.s32 %v488, %v492
    %v494 = vadd.s32 %v493, 536870912
    %v495 = vshrl.u32 %v494, 30
    %v496 = vshll.u32 %v495, 30
    %v497 = vsub.s32 %v493, %v496
    %vm498 = vcmp.lt.s32.totalorder %v497, 0
    %v499 = vsub.s32 0, %v497
    %v500 = vsel %vm498, %v499, %v497
    %v501 = vclz %v500
    %v502 = vsub.s32 %v501, 2
    %vm503 = vcmp.gt.s32.totalorder 0, %v502
    %v504 = vsel %vm503, 0, %v502
    %v505 = vsub.s32 32, %v504
    %v506 = vshll.u32 %v497, %v504
    %v507 = vshrl.u32 %v489, %v505
    %v508 = vor.u32 %v506, %v507
    %v509 = vsub.s32 4294967266, %v504
    %v510 = vadd.s32 %v509, 127
    %v511 = vshll.u32 %v510, 23
    %v512 = vor.u32 4788187, %v511
    %v513 = vand.u32 2147483647, %v512
    %v515 = vcvt.s32.f32 %v508
    %v516 = vmul.f32 %v515, %v513
    %v517 = vxor.u32 %v516, 2147483648
    %v518 = vsel %vm435, %v517, %v516
    %v519 = vsub.s32 4, %v495
    %v520 = vsel %vm435, %v519, %v495
    %v521 = vsel %vm434, %v107, %v518
    %v522 = vsel %vm434, 0, %v520
    %v523 = vcosq.f32.pop %v521
    %v524 = vsinq.f32.pop %v521
    %vm525 = vweird.f32 %v107
    %v526 = vand.u32 %v522, 3
    %vm527 = vcmp.lt.s32.totalorder %v526, 2
    %vm528 = vcmp.eq.s32.totalorder %v526, 0
    %v529 = vxor.u32 %v524, 2147483648
    %v530 = vsel %vm528, %v523, %v529
    %vm531 = vcmp.eq.s32.totalorder %v526, 2
    %v532 = vxor.u32 %v523, 2147483648
    %v533 = vsel %vm531, %v532, %v524
    %v534 = vsel %vm527, %v530, %v533
    %v535 = vsel %vm525, nan, %v534
    %v536 = vand.u32 2147483647, %v108
    %vm537 = vcmp.le.f32.partialorder %v536, 0.7853982
    %vm538 = vcmp.lt.s32.totalorder %v108, 0
    %v539 = vand.u32 %v108, 2139095040
    %v540 = vshrl.u32 %v539, 23
    %v541 = vsub.s32 %v540, 127
    %v542 = vand.u32 2147483647, %v108
    %v543 = vand.u32 %v542, 8388607
    %v544 = vor.u32 %v543, 8388608
    %v545 = vsub.s32 0, %v544
    %v546 = vadd.s32 %v541, 1
    %vm547 = vcmp.gt.s32.totalorder %v546, 0
    %v548 = vsel %vm547, %v546, 0
    %v549 = vshrl.u32 %v548, 5
    %v550 = vand.u32 %v548, 31
    %v551 = vsub.s32 32, %v550
    %v552 = vshrl.u32 683565275, %v551
    %v553 = vshll.u32 683565275, %v550
    %v554 = vshrl.u32 2475754826, %v551
    %v555 = vor.u32 %v553, %v554
    %v556 = vshll.u32 2475754826, %v550
    %v557 = vshrl.u32 2131351028, %v551
    %v558 = vor.u32 %v556, %v557
    %v559 = vshll.u32 2131351028, %v550
    %v560 = vshrl.u32 2102212464, %v551
    %v561 = vor.u32 %v559, %v560
    %v562 = vshll.u32 2102212464, %v550
    %v563 = vshrl.u32 920167782, %v551
    %v564 = vor.u32 %v562, %v563
    %v565 = vshll.u32 920167782, %v550
    %v566 = vshrl.u32 1326507024, %v551
    %v567 = vor.u32 %v565, %v566
    %vm568 = vcmp.lt.s32.totalorder %v549, 1
    %vm569 = vcmp.lt.s32.totalorder %v549, 2
    %vm570 = vcmp.lt.s32.totalorder %v549, 3
    %vm571 = vcmp.lt.s32.totalorder %v549, 4
    %v572 = vsel %vm568, %v552, %v555
    %v573 = vsel %vm571, %v561, 2102212464
    %v574 = vsel %vm570, %v558, %v573
    %v575 = vsel %vm569, %v572, %v574
    %v576 = vsel %vm568, %v555, %v558
    %v577 = vsel %vm571, %v564, 920167782
    %v578 = vsel %vm570, %v561, %v577
    %v579 = vsel %vm569, %v576, %v578
    %v580 = vsel %vm568, %v558, %v561
    %v581 = vsel %vm571, %v567, 1326507024
    %v582 = vsel %vm570, %v564, %v581
    %v583 = vsel %vm569, %v580, %v582
    %v584 = vshll.u32 %v544, 8
    %v585 = vmul.u32.u64.compose %v584, %v583
    %v586 = vextract.low.u32 %v585
    %v587 = vextract.high.u32 %v585
    %v588 = vmul.u32.u64.compose %v584, %v579
    %v589 = vextract.low.u32 %v588
    %v590 = vextract.high.u32 %v588
    %v591 = vmul.u32 %v584, %v575
    %v592 = vadd.s32 %v587, %v589
    %vm593 = vc.u32 %v587, %v589
    %v594 = vadd.s32 %v590, 1
    %v595 = vsel %vm593, %v594, %v590
    %v596 = vadd.s32 %v591, %v595
    %v597 = vadd.s32 %v596, 536870912
    %v598 = vshrl.u32 %v597, 30
    %v599 = vshll.u32 %v598, 30
    %v600 = vsub.s32 %v596, %v599
    %vm601 = vcmp.lt.s32.totalorder %v600, 0
    %v602 = vsub.s32 0, %v600
    %v603 = vsel %vm601, %v602, %v600
    %v604 = vclz %v603
    %v605 = vsub.s32 %v604, 2
    %vm606 = vcmp.gt.s32.totalorder 0, %v605
    %v607 = vsel %vm606, 0, %v605
    %v608 = vsub.s32 32, %v607
    %v609 = vshll.u32 %v600, %v607
    %v610 = vshrl.u32 %v592, %v608
    %v611 = vor.u32 %v609, %v610
    %v612 = vsub.s32 4294967266, %v607
    %v613 = vadd.s32 %v612, 127
    %v614 = vshll.u32 %v613, 23
    %v615 = vor.u32 4788187, %v614
    %v616 = vand.u32 2147483647, %v615
    %v618 = vcvt.s32.f32 %v611
    %v619 = vmul.f32 %v618, %v616
    %v620 = vxor.u32 %v619, 2147483648
    %v621 = vsel %vm538, %v620, %v619
    %v622 = vsub.s32 4, %v598
    %v623 = vsel %vm538, %v622, %v598
    %v624 = vsel %vm537, %v108, %v621
    %v625 = vsel %vm537, 0, %v623
    %v626 = vcosq.f32.pop %v624
    %v627 = vsinq.f32.pop %v624
    %vm628 = vweird.f32 %v108
    %v629 = vand.u32 %v625, 3
    %vm630 = vcmp.lt.s32.totalorder %v629, 2
    %vm631 = vcmp.eq.s32.totalorder %v629, 0
    %v632 = vxor.u32 %v627, 2147483648
    %v633 = vsel %vm631, %v626, %v632
    %vm634 = vcmp.eq.s32.totalorder %v629, 2
    %v635 = vxor.u32 %v626, 2147483648
    %v636 = vsel %vm634, %v635, %v627
    %v637 = vsel %vm630, %v633, %v636
    %v638 = vsel %vm628, nan, %v637
    %v639 = vand.u32 2147483647, %v109
    %vm640 = vcmp.le.f32.partialorder %v639, 0.7853982
    %vm641 = vcmp.lt.s32.totalorder %v109, 0
    %v642 = vand.u32 %v109, 2139095040
    %v643 = vshrl.u32 %v642, 23
    %v644 = vsub.s32 %v643, 127
    %v645 = vand.u32 2147483647, %v109
    %v646 = vand.u32 %v645, 8388607
    %v647 = vor.u32 %v646, 8388608
    %v648 = vsub.s32 0, %v647
    %v649 = vadd.s32 %v644, 1
    %vm650 = vcmp.gt.s32.totalorder %v649, 0
    %v651 = vsel %vm650, %v649, 0
    %v652 = vshrl.u32 %v651, 5
    %v653 = vand.u32 %v651, 31
    %v654 = vsub.s32 32, %v653
    %v655 = vshrl.u32 683565275, %v654
    %v656 = vshll.u32 683565275, %v653
    %v657 = vshrl.u32 2475754826, %v654
    %v658 = vor.u32 %v656, %v657
    %v659 = vshll.u32 2475754826, %v653
    %v660 = vshrl.u32 2131351028, %v654
    %v661 = vor.u32 %v659, %v660
    %v662 = vshll.u32 2131351028, %v653
    %v663 = vshrl.u32 2102212464, %v654
    %v664 = vor.u32 %v662, %v663
    %v665 = vshll.u32 2102212464, %v653
    %v666 = vshrl.u32 920167782, %v654
    %v667 = vor.u32 %v665, %v666
    %v668 = vshll.u32 920167782, %v653
    %v669 = vshrl.u32 1326507024, %v654
    %v670 = vor.u32 %v668, %v669
    %vm671 = vcmp.lt.s32.totalorder %v652, 1
    %vm672 = vcmp.lt.s32.totalorder %v652, 2
    %vm673 = vcmp.lt.s32.totalorder %v652, 3
    %vm674 = vcmp.lt.s32.totalorder %v652, 4
    %v675 = vsel %vm671, %v655, %v658
    %v676 = vsel %vm674, %v664, 2102212464
    %v677 = vsel %vm673, %v661, %v676
    %v678 = vsel %vm672, %v675, %v677
    %v679 = vsel %vm671, %v658, %v661
    %v680 = vsel %vm674, %v667, 920167782
    %v681 = vsel %vm673, %v664, %v680
    %v682 = vsel %vm672, %v679, %v681
    %v683 = vsel %vm671, %v661, %v664
    %v684 = vsel %vm674, %v670, 1326507024
    %v685 = vsel %vm673, %v667, %v684
    %v686 = vsel %vm672, %v683, %v685
    %v687 = vshll.u32 %v647, 8
    %v688 = vmul.u32.u64.compose %v687, %v686
    %v689 = vextract.low.u32 %v688
    %v690 = vextract.high.u32 %v688
    %v691 = vmul.u32.u64.compose %v687, %v682
    %v692 = vextract.low.u32 %v691
    %v693 = vextract.high.u32 %v691
    %v694 = vmul.u32 %v687, %v678
    %v695 = vadd.s32 %v690, %v692
    %vm696 = vc.u32 %v690, %v692
    %v697 = vadd.s32 %v693, 1
    %v698 = vsel %vm696, %v697, %v693
    %v699 = vadd.s32 %v694, %v698
    %v700 = vadd.s32 %v699, 536870912
    %v701 = vshrl.u32 %v700, 30
    %v702 = vshll.u32 %v701, 30
    %v703 = vsub.s32 %v699, %v702
    %vm704 = vcmp.lt.s32.totalorder %v703, 0
    %v705 = vsub.s32 0, %v703
    %v706 = vsel %vm704, %v705, %v703
    %v707 = vclz %v706
    %v708 = vsub.s32 %v707, 2
    %vm709 = vcmp.gt.s32.totalorder 0, %v708
    %v710 = vsel %vm709, 0, %v708
    %v711 = vsub.s32 32, %v710
    %v712 = vshll.u32 %v703, %v710
    %v713 = vshrl.u32 %v695, %v711
    %v714 = vor.u32 %v712, %v713
    %v715 = vsub.s32 4294967266, %v710
    %v716 = vadd.s32 %v715, 127
    %v717 = vshll.u32 %v716, 23
    %v718 = vor.u32 4788187, %v717
    %v719 = vand.u32 2147483647, %v718
    %v721 = vcvt.s32.f32 %v714
    %v722 = vmul.f32 %v721, %v719
    %v723 = vxor.u32 %v722, 2147483648
    %v724 = vsel %vm641, %v723, %v722
    %v725 = vsub.s32 4, %v701
    %v726 = vsel %vm641, %v725, %v701
    %v727 = vsel %vm640, %v109, %v724
    %v728 = vsel %vm640, 0, %v726
    %v729 = vcosq.f32.pop %v727
    %v730 = vsinq.f32.pop %v727
    %vm731 = vweird.f32 %v109
    %v732 = vand.u32 %v728, 3
    %vm733 = vcmp.lt.s32.totalorder %v732, 2
    %vm734 = vcmp.eq.s32.totalorder %v732, 0
    %v735 = vxor.u32 %v730, 2147483648
    %v736 = vsel %vm734, %v729, %v735
    %vm737 = vcmp.eq.s32.totalorder %v732, 2
    %v738 = vxor.u32 %v729, 2147483648
    %v739 = vsel %vm737, %v738, %v730
    %v740 = vsel %vm733, %v736, %v739
    %v741 = vsel %vm731, nan, %v740
    %v742 = vand.u32 2147483647, %v110
    %vm743 = vcmp.le.f32.partialorder %v742, 0.7853982
    %vm744 = vcmp.lt.s32.totalorder %v110, 0
    %v745 = vand.u32 %v110, 2139095040
    %v746 = vshrl.u32 %v745, 23
    %v747 = vsub.s32 %v746, 127
    %v748 = vand.u32 2147483647, %v110
    %v749 = vand.u32 %v748, 8388607
    %v750 = vor.u32 %v749, 8388608
    %v751 = vsub.s32 0, %v750
    %v752 = vadd.s32 %v747, 1
    %vm753 = vcmp.gt.s32.totalorder %v752, 0
    %v754 = vsel %vm753, %v752, 0
    %v755 = vshrl.u32 %v754, 5
    %v756 = vand.u32 %v754, 31
    %v757 = vsub.s32 32, %v756
    %v758 = vshrl.u32 683565275, %v757
    %v759 = vshll.u32 683565275, %v756
    %v760 = vshrl.u32 2475754826, %v757
    %v761 = vor.u32 %v759, %v760
    %v762 = vshll.u32 2475754826, %v756
    %v763 = vshrl.u32 2131351028, %v757
    %v764 = vor.u32 %v762, %v763
    %v765 = vshll.u32 2131351028, %v756
    %v766 = vshrl.u32 2102212464, %v757
    %v767 = vor.u32 %v765, %v766
    %v768 = vshll.u32 2102212464, %v756
    %v769 = vshrl.u32 920167782, %v757
    %v770 = vor.u32 %v768, %v769
    %v771 = vshll.u32 920167782, %v756
    %v772 = vshrl.u32 1326507024, %v757
    %v773 = vor.u32 %v771, %v772
    %vm774 = vcmp.lt.s32.totalorder %v755, 1
    %vm775 = vcmp.lt.s32.totalorder %v755, 2
    %vm776 = vcmp.lt.s32.totalorder %v755, 3
    %vm777 = vcmp.lt.s32.totalorder %v755, 4
    %v778 = vsel %vm774, %v758, %v761
    %v779 = vsel %vm777, %v767, 2102212464
    %v780 = vsel %vm776, %v764, %v779
    %v781 = vsel %vm775, %v778, %v780
    %v782 = vsel %vm774, %v761, %v764
    %v783 = vsel %vm777, %v770, 920167782
    %v784 = vsel %vm776, %v767, %v783
    %v785 = vsel %vm775, %v782, %v784
    %v786 = vsel %vm774, %v764, %v767
    %v787 = vsel %vm777, %v773, 1326507024
    %v788 = vsel %vm776, %v770, %v787
    %v789 = vsel %vm775, %v786, %v788
    %v790 = vshll.u32 %v750, 8
    %v791 = vmul.u32.u64.compose %v790, %v789
    %v792 = vextract.low.u32 %v791
    %v793 = vextract.high.u32 %v791
    %v794 = vmul.u32.u64.compose %v790, %v785
    %v795 = vextract.low.u32 %v794
    %v796 = vextract.high.u32 %v794
    %v797 = vmul.u32 %v790, %v781
    %v798 = vadd.s32 %v793, %v795
    %vm799 = vc.u32 %v793, %v795
    %v800 = vadd.s32 %v796, 1
    %v801 = vsel %vm799, %v800, %v796
    %v802 = vadd.s32 %v797, %v801
    %v803 = vadd.s32 %v802, 536870912
    %v804 = vshrl.u32 %v803, 30
    %v805 = vshll.u32 %v804, 30
    %v806 = vsub.s32 %v802, %v805
    %vm807 = vcmp.lt.s32.totalorder %v806, 0
    %v808 = vsub.s32 0, %v806
    %v809 = vsel %vm807, %v808, %v806
    %v810 = vclz %v809
    %v811 = vsub.s32 %v810, 2
    %vm812 = vcmp.gt.s32.totalorder 0, %v811
    %v813 = vsel %vm812, 0, %v811
    %v814 = vsub.s32 32, %v813
    %v815 = vshll.u32 %v806, %v813
    %v816 = vshrl.u32 %v798, %v814
    %v817 = vor.u32 %v815, %v816
    %v818 = vsub.s32 4294967266, %v813
    %v819 = vadd.s32 %v818, 127
    %v820 = vshll.u32 %v819, 23
    %v821 = vor.u32 4788187, %v820
    %v822 = vand.u32 2147483647, %v821
    %v824 = vcvt.s32.f32 %v817
    %v825 = vmul.f32 %v824, %v822
    %v826 = vxor.u32 %v825, 2147483648
    %v827 = vsel %vm744, %v826, %v825
    %v828 = vsub.s32 4, %v804
    %v829 = vsel %vm744, %v828, %v804
    %v830 = vsel %vm743, %v110, %v827
    %v831 = vsel %vm743, 0, %v829
    %v832 = vcosq.f32.pop %v830
    %v833 = vsinq.f32.pop %v830
    %vm834 = vweird.f32 %v110
    %v835 = vand.u32 %v831, 3
    %vm836 = vcmp.lt.s32.totalorder %v835, 2
    %vm837 = vcmp.eq.s32.totalorder %v835, 0
    %v838 = vxor.u32 %v833, 2147483648
    %v839 = vsel %vm837, %v832, %v838
    %vm840 = vcmp.eq.s32.totalorder %v835, 2
    %v841 = vxor.u32 %v832, 2147483648
    %v842 = vsel %vm840, %v841, %v833
    %v843 = vsel %vm836, %v839, %v842
    %v844 = vsel %vm834, nan, %v843
    %v845 = vand.u32 2147483647, %v111
    %vm846 = vcmp.le.f32.partialorder %v845, 0.7853982
    %vm847 = vcmp.lt.s32.totalorder %v111, 0
    %v848 = vand.u32 %v111, 2139095040
    %v849 = vshrl.u32 %v848, 23
    %v850 = vsub.s32 %v849, 127
    %v851 = vand.u32 2147483647, %v111
    %v852 = vand.u32 %v851, 8388607
    %v853 = vor.u32 %v852, 8388608
    %v854 = vsub.s32 0, %v853
    %v855 = vadd.s32 %v850, 1
    %vm856 = vcmp.gt.s32.totalorder %v855, 0
    %v857 = vsel %vm856, %v855, 0
    %v858 = vshrl.u32 %v857, 5
    %v859 = vand.u32 %v857, 31
    %v860 = vsub.s32 32, %v859
    %v861 = vshrl.u32 683565275, %v860
    %v862 = vshll.u32 683565275, %v859
    %v863 = vshrl.u32 2475754826, %v860
    %v864 = vor.u32 %v862, %v863
    %v865 = vshll.u32 2475754826, %v859
    %v866 = vshrl.u32 2131351028, %v860
    %v867 = vor.u32 %v865, %v866
    %v868 = vshll.u32 2131351028, %v859
    %v869 = vshrl.u32 2102212464, %v860
    %v870 = vor.u32 %v868, %v869
    %v871 = vshll.u32 2102212464, %v859
    %v872 = vshrl.u32 920167782, %v860
    %v873 = vor.u32 %v871, %v872
    %v874 = vshll.u32 920167782, %v859
    %v875 = vshrl.u32 1326507024, %v860
    %v876 = vor.u32 %v874, %v875
    %vm877 = vcmp.lt.s32.totalorder %v858, 1
    %vm878 = vcmp.lt.s32.totalorder %v858, 2
    %vm879 = vcmp.lt.s32.totalorder %v858, 3
    %vm880 = vcmp.lt.s32.totalorder %v858, 4
    %v881 = vsel %vm877, %v861, %v864
    %v882 = vsel %vm880, %v870, 2102212464
    %v883 = vsel %vm879, %v867, %v882
    %v884 = vsel %vm878, %v881, %v883
    %v885 = vsel %vm877, %v864, %v867
    %v886 = vsel %vm880, %v873, 920167782
    %v887 = vsel %vm879, %v870, %v886
    %v888 = vsel %vm878, %v885, %v887
    %v889 = vsel %vm877, %v867, %v870
    %v890 = vsel %vm880, %v876, 1326507024
    %v891 = vsel %vm879, %v873, %v890
    %v892 = vsel %vm878, %v889, %v891
    %v893 = vshll.u32 %v853, 8
    %v894 = vmul.u32.u64.compose %v893, %v892
    %v895 = vextract.low.u32 %v894
    %v896 = vextract.high.u32 %v894
    %v897 = vmul.u32.u64.compose %v893, %v888
    %v898 = vextract.low.u32 %v897
    %v899 = vextract.high.u32 %v897
    %v900 = vmul.u32 %v893, %v884
    %v901 = vadd.s32 %v896, %v898
    %vm902 = vc.u32 %v896, %v898
    %v903 = vadd.s32 %v899, 1
    %v904 = vsel %vm902, %v903, %v899
    %v905 = vadd.s32 %v900, %v904
    %v906 = vadd.s32 %v905, 536870912
    %v907 = vshrl.u32 %v906, 30
    %v908 = vshll.u32 %v907, 30
    %v909 = vsub.s32 %v905, %v908
    %vm910 = vcmp.lt.s32.totalorder %v909, 0
    %v911 = vsub.s32 0, %v909
    %v912 = vsel %vm910, %v911, %v909
    %v913 = vclz %v912
    %v914 = vsub.s32 %v913, 2
    %vm915 = vcmp.gt.s32.totalorder 0, %v914
    %v916 = vsel %vm915, 0, %v914
    %v917 = vsub.s32 32, %v916
    %v918 = vshll.u32 %v909, %v916
    %v919 = vshrl.u32 %v901, %v917
    %v920 = vor.u32 %v918, %v919
    %v921 = vsub.s32 4294967266, %v916
    %v922 = vadd.s32 %v921, 127
    %v923 = vshll.u32 %v922, 23
    %v924 = vor.u32 4788187, %v923
    %v925 = vand.u32 2147483647, %v924
    %v927 = vcvt.s32.f32 %v920
    %v928 = vmul.f32 %v927, %v925
    %v929 = vxor.u32 %v928, 2147483648
    %v930 = vsel %vm847, %v929, %v928
    %v931 = vsub.s32 4, %v907
    %v932 = vsel %vm847, %v931, %v907
    %v933 = vsel %vm846, %v111, %v930
    %v934 = vsel %vm846, 0, %v932
    %v935 = vcosq.f32.pop %v933
    %v936 = vsinq.f32.pop %v933
    %vm937 = vweird.f32 %v111
    %v938 = vand.u32 %v934, 3
    %vm939 = vcmp.lt.s32.totalorder %v938, 2
    %vm940 = vcmp.eq.s32.totalorder %v938, 0
    %v941 = vxor.u32 %v936, 2147483648
    %v942 = vsel %vm940, %v935, %v941
    %vm943 = vcmp.eq.s32.totalorder %v938, 2
    %v944 = vxor.u32 %v935, 2147483648
    %v945 = vsel %vm943, %v944, %v936
    %v946 = vsel %vm939, %v942, %v945
    %v947 = vsel %vm937, nan, %v946
    %v948 = vand.u32 2147483647, %v112
    %vm949 = vcmp.le.f32.partialorder %v948, 0.7853982
    %vm950 = vcmp.lt.s32.totalorder %v112, 0
    %v951 = vand.u32 %v112, 2139095040
    %v952 = vshrl.u32 %v951, 23
    %v953 = vsub.s32 %v952, 127
    %v954 = vand.u32 2147483647, %v112
    %v955 = vand.u32 %v954, 8388607
    %v956 = vor.u32 %v955, 8388608
    %v957 = vsub.s32 0, %v956
    %v958 = vadd.s32 %v953, 1
    %vm959 = vcmp.gt.s32.totalorder %v958, 0
    %v960 = vsel %vm959, %v958, 0
    %v961 = vshrl.u32 %v960, 5
    %v962 = vand.u32 %v960, 31
    %v963 = vsub.s32 32, %v962
    %v964 = vshrl.u32 683565275, %v963
    %v965 = vshll.u32 683565275, %v962
    %v966 = vshrl.u32 2475754826, %v963
    %v967 = vor.u32 %v965, %v966
    %v968 = vshll.u32 2475754826, %v962
    %v969 = vshrl.u32 2131351028, %v963
    %v970 = vor.u32 %v968, %v969
    %v971 = vshll.u32 2131351028, %v962
    %v972 = vshrl.u32 2102212464, %v963
    %v973 = vor.u32 %v971, %v972
    %v974 = vshll.u32 2102212464, %v962
    %v975 = vshrl.u32 920167782, %v963
    %v976 = vor.u32 %v974, %v975
    %v977 = vshll.u32 920167782, %v962
    %v978 = vshrl.u32 1326507024, %v963
    %v979 = vor.u32 %v977, %v978
    %vm980 = vcmp.lt.s32.totalorder %v961, 1
    %vm981 = vcmp.lt.s32.totalorder %v961, 2
    %vm982 = vcmp.lt.s32.totalorder %v961, 3
    %vm983 = vcmp.lt.s32.totalorder %v961, 4
    %v984 = vsel %vm980, %v964, %v967
    %v985 = vsel %vm983, %v973, 2102212464
    %v986 = vsel %vm982, %v970, %v985
    %v987 = vsel %vm981, %v984, %v986
    %v988 = vsel %vm980, %v967, %v970
    %v989 = vsel %vm983, %v976, 920167782
    %v990 = vsel %vm982, %v973, %v989
    %v991 = vsel %vm981, %v988, %v990
    %v992 = vsel %vm980, %v970, %v973
    %v993 = vsel %vm983, %v979, 1326507024
    %v994 = vsel %vm982, %v976, %v993
    %v995 = vsel %vm981, %v992, %v994
    %v996 = vshll.u32 %v956, 8
    %v997 = vmul.u32.u64.compose %v996, %v995
    %v998 = vextract.low.u32 %v997
    %v999 = vextract.high.u32 %v997
    %v1000 = vmul.u32.u64.compose %v996, %v991
    %v1001 = vextract.low.u32 %v1000
    %v1002 = vextract.high.u32 %v1000
    %v1003 = vmul.u32 %v996, %v987
    %v1004 = vadd.s32 %v999, %v1001
    %vm1005 = vc.u32 %v999, %v1001
    %v1006 = vadd.s32 %v1002, 1
    %v1007 = vsel %vm1005, %v1006, %v1002
    %v1008 = vadd.s32 %v1003, %v1007
    %v1009 = vadd.s32 %v1008, 536870912
    %v1010 = vshrl.u32 %v1009, 30
    %v1011 = vshll.u32 %v1010, 30
    %v1012 = vsub.s32 %v1008, %v1011
    %vm1013 = vcmp.lt.s32.totalorder %v1012, 0
    %v1014 = vsub.s32 0, %v1012
    %v1015 = vsel %vm1013, %v1014, %v1012
    %v1016 = vclz %v1015
    %v1017 = vsub.s32 %v1016, 2
    %vm1018 = vcmp.gt.s32.totalorder 0, %v1017
    %v1019 = vsel %vm1018, 0, %v1017
    %v1020 = vsub.s32 32, %v1019
    %v1021 = vshll.u32 %v1012, %v1019
    %v1022 = vshrl.u32 %v1004, %v1020
    %v1023 = vor.u32 %v1021, %v1022
    %v1024 = vsub.s32 4294967266, %v1019
    %v1025 = vadd.s32 %v1024, 127
    %v1026 = vshll.u32 %v1025, 23
    %v1027 = vor.u32 4788187, %v1026
    %v1028 = vand.u32 2147483647, %v1027
    %v1030 = vcvt.s32.f32 %v1023
    %v1031 = vmul.f32 %v1030, %v1028
    %v1032 = vxor.u32 %v1031, 2147483648
    %v1033 = vsel %vm950, %v1032, %v1031
    %v1034 = vsub.s32 4, %v1010
    %v1035 = vsel %vm950, %v1034, %v1010
    %v1036 = vsel %vm949, %v112, %v1033
    %v1037 = vsel %vm949, 0, %v1035
    %v1038 = vcosq.f32.pop %v1036
    %v1039 = vsinq.f32.pop %v1036
    %vm1040 = vweird.f32 %v112
    %v1041 = vand.u32 %v1037, 3
    %vm1042 = vcmp.lt.s32.totalorder %v1041, 2
    %vm1043 = vcmp.eq.s32.totalorder %v1041, 0
    %v1044 = vxor.u32 %v1039, 2147483648
    %v1045 = vsel %vm1043, %v1038, %v1044
    %vm1046 = vcmp.eq.s32.totalorder %v1041, 2
    %v1047 = vxor.u32 %v1038, 2147483648
    %v1048 = vsel %vm1046, %v1047, %v1039
    %v1049 = vsel %vm1042, %v1045, %v1048
    %v1050 = vsel %vm1040, nan, %v1049
    %v1051 = vand.u32 2147483647, %v113
    %vm1052 = vcmp.le.f32.partialorder %v1051, 0.7853982
    %vm1053 = vcmp.lt.s32.totalorder %v113, 0
    %v1054 = vand.u32 %v113, 2139095040
    %v1055 = vshrl.u32 %v1054, 23
    %v1056 = vsub.s32 %v1055, 127
    %v1057 = vand.u32 2147483647, %v113
    %v1058 = vand.u32 %v1057, 8388607
    %v1059 = vor.u32 %v1058, 8388608
    %v1060 = vsub.s32 0, %v1059
    %v1061 = vadd.s32 %v1056, 1
    %vm1062 = vcmp.gt.s32.totalorder %v1061, 0
    %v1063 = vsel %vm1062, %v1061, 0
    %v1064 = vshrl.u32 %v1063, 5
    %v1065 = vand.u32 %v1063, 31
    %v1066 = vsub.s32 32, %v1065
    %v1067 = vshrl.u32 683565275, %v1066
    %v1068 = vshll.u32 683565275, %v1065
    %v1069 = vshrl.u32 2475754826, %v1066
    %v1070 = vor.u32 %v1068, %v1069
    %v1071 = vshll.u32 2475754826, %v1065
    %v1072 = vshrl.u32 2131351028, %v1066
    %v1073 = vor.u32 %v1071, %v1072
    %v1074 = vshll.u32 2131351028, %v1065
    %v1075 = vshrl.u32 2102212464, %v1066
    %v1076 = vor.u32 %v1074, %v1075
    %v1077 = vshll.u32 2102212464, %v1065
    %v1078 = vshrl.u32 920167782, %v1066
    %v1079 = vor.u32 %v1077, %v1078
    %v1080 = vshll.u32 920167782, %v1065
    %v1081 = vshrl.u32 1326507024, %v1066
    %v1082 = vor.u32 %v1080, %v1081
    %vm1083 = vcmp.lt.s32.totalorder %v1064, 1
    %vm1084 = vcmp.lt.s32.totalorder %v1064, 2
    %vm1085 = vcmp.lt.s32.totalorder %v1064, 3
    %vm1086 = vcmp.lt.s32.totalorder %v1064, 4
    %v1087 = vsel %vm1083, %v1067, %v1070
    %v1088 = vsel %vm1086, %v1076, 2102212464
    %v1089 = vsel %vm1085, %v1073, %v1088
    %v1090 = vsel %vm1084, %v1087, %v1089
    %v1091 = vsel %vm1083, %v1070, %v1073
    %v1092 = vsel %vm1086, %v1079, 920167782
    %v1093 = vsel %vm1085, %v1076, %v1092
    %v1094 = vsel %vm1084, %v1091, %v1093
    %v1095 = vsel %vm1083, %v1073, %v1076
    %v1096 = vsel %vm1086, %v1082, 1326507024
    %v1097 = vsel %vm1085, %v1079, %v1096
    %v1098 = vsel %vm1084, %v1095, %v1097
    %v1099 = vshll.u32 %v1059, 8
    %v1100 = vmul.u32.u64.compose %v1099, %v1098
    %v1101 = vextract.low.u32 %v1100
    %v1102 = vextract.high.u32 %v1100
    %v1103 = vmul.u32.u64.compose %v1099, %v1094
    %v1104 = vextract.low.u32 %v1103
    %v1105 = vextract.high.u32 %v1103
    %v1106 = vmul.u32 %v1099, %v1090
    %v1107 = vadd.s32 %v1102, %v1104
    %vm1108 = vc.u32 %v1102, %v1104
    %v1109 = vadd.s32 %v1105, 1
    %v1110 = vsel %vm1108, %v1109, %v1105
    %v1111 = vadd.s32 %v1106, %v1110
    %v1112 = vadd.s32 %v1111, 536870912
    %v1113 = vshrl.u32 %v1112, 30
    %v1114 = vshll.u32 %v1113, 30
    %v1115 = vsub.s32 %v1111, %v1114
    %vm1116 = vcmp.lt.s32.totalorder %v1115, 0
    %v1117 = vsub.s32 0, %v1115
    %v1118 = vsel %vm1116, %v1117, %v1115
    %v1119 = vclz %v1118
    %v1120 = vsub.s32 %v1119, 2
    %vm1121 = vcmp.gt.s32.totalorder 0, %v1120
    %v1122 = vsel %vm1121, 0, %v1120
    %v1123 = vsub.s32 32, %v1122
    %v1124 = vshll.u32 %v1115, %v1122
    %v1125 = vshrl.u32 %v1107, %v1123
    %v1126 = vor.u32 %v1124, %v1125
    %v1127 = vsub.s32 4294967266, %v1122
    %v1128 = vadd.s32 %v1127, 127
    %v1129 = vshll.u32 %v1128, 23
    %v1130 = vor.u32 4788187, %v1129
    %v1131 = vand.u32 2147483647, %v1130
    %v1133 = vcvt.s32.f32 %v1126
    %v1134 = vmul.f32 %v1133, %v1131
    %v1135 = vxor.u32 %v1134, 2147483648
    %v1136 = vsel %vm1053, %v1135, %v1134
    %v1137 = vsub.s32 4, %v1113
    %v1138 = vsel %vm1053, %v1137, %v1113
    %v1139 = vsel %vm1052, %v113, %v1136
    %v1140 = vsel %vm1052, 0, %v1138
    %v1141 = vcosq.f32.pop %v1139
    %v1142 = vsinq.f32.pop %v1139
    %vm1143 = vweird.f32 %v113
    %v1144 = vand.u32 %v1140, 3
    %vm1145 = vcmp.lt.s32.totalorder %v1144, 2
    %vm1146 = vcmp.eq.s32.totalorder %v1144, 0
    %v1147 = vxor.u32 %v1142, 2147483648
    %v1148 = vsel %vm1146, %v1141, %v1147
    %vm1149 = vcmp.eq.s32.totalorder %v1144, 2
    %v1150 = vxor.u32 %v1141, 2147483648
    %v1151 = vsel %vm1149, %v1150, %v1142
    %v1152 = vsel %vm1145, %v1148, %v1151
    %v1153 = vsel %vm1143, nan, %v1152
    %v1154 = vand.u32 2147483647, %v114
    %vm1155 = vcmp.le.f32.partialorder %v1154, 0.7853982
    %vm1156 = vcmp.lt.s32.totalorder %v114, 0
    %v1157 = vand.u32 %v114, 2139095040
    %v1158 = vshrl.u32 %v1157, 23
    %v1159 = vsub.s32 %v1158, 127
    %v1160 = vand.u32 2147483647, %v114
    %v1161 = vand.u32 %v1160, 8388607
    %v1162 = vor.u32 %v1161, 8388608
    %v1163 = vsub.s32 0, %v1162
    %v1164 = vadd.s32 %v1159, 1
    %vm1165 = vcmp.gt.s32.totalorder %v1164, 0
    %v1166 = vsel %vm1165, %v1164, 0
    %v1167 = vshrl.u32 %v1166, 5
    %v1168 = vand.u32 %v1166, 31
    %v1169 = vsub.s32 32, %v1168
    %v1170 = vshrl.u32 683565275, %v1169
    %v1171 = vshll.u32 683565275, %v1168
    %v1172 = vshrl.u32 2475754826, %v1169
    %v1173 = vor.u32 %v1171, %v1172
    %v1174 = vshll.u32 2475754826, %v1168
    %v1175 = vshrl.u32 2131351028, %v1169
    %v1176 = vor.u32 %v1174, %v1175
    %v1177 = vshll.u32 2131351028, %v1168
    %v1178 = vshrl.u32 2102212464, %v1169
    %v1179 = vor.u32 %v1177, %v1178
    %v1180 = vshll.u32 2102212464, %v1168
    %v1181 = vshrl.u32 920167782, %v1169
    %v1182 = vor.u32 %v1180, %v1181
    %v1183 = vshll.u32 920167782, %v1168
    %v1184 = vshrl.u32 1326507024, %v1169
    %v1185 = vor.u32 %v1183, %v1184
    %vm1186 = vcmp.lt.s32.totalorder %v1167, 1
    %vm1187 = vcmp.lt.s32.totalorder %v1167, 2
    %vm1188 = vcmp.lt.s32.totalorder %v1167, 3
    %vm1189 = vcmp.lt.s32.totalorder %v1167, 4
    %v1190 = vsel %vm1186, %v1170, %v1173
    %v1191 = vsel %vm1189, %v1179, 2102212464
    %v1192 = vsel %vm1188, %v1176, %v1191
    %v1193 = vsel %vm1187, %v1190, %v1192
    %v1194 = vsel %vm1186, %v1173, %v1176
    %v1195 = vsel %vm1189, %v1182, 920167782
    %v1196 = vsel %vm1188, %v1179, %v1195
    %v1197 = vsel %vm1187, %v1194, %v1196
    %v1198 = vsel %vm1186, %v1176, %v1179
    %v1199 = vsel %vm1189, %v1185, 1326507024
    %v1200 = vsel %vm1188, %v1182, %v1199
    %v1201 = vsel %vm1187, %v1198, %v1200
    %v1202 = vshll.u32 %v1162, 8
    %v1203 = vmul.u32.u64.compose %v1202, %v1201
    %v1204 = vextract.low.u32 %v1203
    %v1205 = vextract.high.u32 %v1203
    %v1206 = vmul.u32.u64.compose %v1202, %v1197
    %v1207 = vextract.low.u32 %v1206
    %v1208 = vextract.high.u32 %v1206
    %v1209 = vmul.u32 %v1202, %v1193
    %v1210 = vadd.s32 %v1205, %v1207
    %vm1211 = vc.u32 %v1205, %v1207
    %v1212 = vadd.s32 %v1208, 1
    %v1213 = vsel %vm1211, %v1212, %v1208
    %v1214 = vadd.s32 %v1209, %v1213
    %v1215 = vadd.s32 %v1214, 536870912
    %v1216 = vshrl.u32 %v1215, 30
    %v1217 = vshll.u32 %v1216, 30
    %v1218 = vsub.s32 %v1214, %v1217
    %vm1219 = vcmp.lt.s32.totalorder %v1218, 0
    %v1220 = vsub.s32 0, %v1218
    %v1221 = vsel %vm1219, %v1220, %v1218
    %v1222 = vclz %v1221
    %v1223 = vsub.s32 %v1222, 2
    %vm1224 = vcmp.gt.s32.totalorder 0, %v1223
    %v1225 = vsel %vm1224, 0, %v1223
    %v1226 = vsub.s32 32, %v1225
    %v1227 = vshll.u32 %v1218, %v1225
    %v1228 = vshrl.u32 %v1210, %v1226
    %v1229 = vor.u32 %v1227, %v1228
    %v1230 = vsub.s32 4294967266, %v1225
    %v1231 = vadd.s32 %v1230, 127
    %v1232 = vshll.u32 %v1231, 23
    %v1233 = vor.u32 4788187, %v1232
    %v1234 = vand.u32 2147483647, %v1233
    %v1236 = vcvt.s32.f32 %v1229
    %v1237 = vmul.f32 %v1236, %v1234
    %v1238 = vxor.u32 %v1237, 2147483648
    %v1239 = vsel %vm1156, %v1238, %v1237
    %v1240 = vsub.s32 4, %v1216
    %v1241 = vsel %vm1156, %v1240, %v1216
    %v1242 = vsel %vm1155, %v114, %v1239
    %v1243 = vsel %vm1155, 0, %v1241
    %v1244 = vcosq.f32.pop %v1242
    %v1245 = vsinq.f32.pop %v1242
    %vm1246 = vweird.f32 %v114
    %v1247 = vand.u32 %v1243, 3
    %vm1248 = vcmp.lt.s32.totalorder %v1247, 2
    %vm1249 = vcmp.eq.s32.totalorder %v1247, 0
    %v1250 = vxor.u32 %v1245, 2147483648
    %v1251 = vsel %vm1249, %v1244, %v1250
    %vm1252 = vcmp.eq.s32.totalorder %v1247, 2
    %v1253 = vxor.u32 %v1244, 2147483648
    %v1254 = vsel %vm1252, %v1253, %v1245
    %v1255 = vsel %vm1248, %v1251, %v1254
    %v1256 = vsel %vm1246, nan, %v1255
    %v1257 = vand.u32 2147483647, %v115
    %vm1258 = vcmp.le.f32.partialorder %v1257, 0.7853982
    %vm1259 = vcmp.lt.s32.totalorder %v115, 0
    %v1260 = vand.u32 %v115, 2139095040
    %v1261 = vshrl.u32 %v1260, 23
    %v1262 = vsub.s32 %v1261, 127
    %v1263 = vand.u32 2147483647, %v115
    %v1264 = vand.u32 %v1263, 8388607
    %v1265 = vor.u32 %v1264, 8388608
    %v1266 = vsub.s32 0, %v1265
    %v1267 = vadd.s32 %v1262, 1
    %vm1268 = vcmp.gt.s32.totalorder %v1267, 0
    %v1269 = vsel %vm1268, %v1267, 0
    %v1270 = vshrl.u32 %v1269, 5
    %v1271 = vand.u32 %v1269, 31
    %v1272 = vsub.s32 32, %v1271
    %v1273 = vshrl.u32 683565275, %v1272
    %v1274 = vshll.u32 683565275, %v1271
    %v1275 = vshrl.u32 2475754826, %v1272
    %v1276 = vor.u32 %v1274, %v1275
    %v1277 = vshll.u32 2475754826, %v1271
    %v1278 = vshrl.u32 2131351028, %v1272
    %v1279 = vor.u32 %v1277, %v1278
    %v1280 = vshll.u32 2131351028, %v1271
    %v1281 = vshrl.u32 2102212464, %v1272
    %v1282 = vor.u32 %v1280, %v1281
    %v1283 = vshll.u32 2102212464, %v1271
    %v1284 = vshrl.u32 920167782, %v1272
    %v1285 = vor.u32 %v1283, %v1284
    %v1286 = vshll.u32 920167782, %v1271
    %v1287 = vshrl.u32 1326507024, %v1272
    %v1288 = vor.u32 %v1286, %v1287
    %vm1289 = vcmp.lt.s32.totalorder %v1270, 1
    %vm1290 = vcmp.lt.s32.totalorder %v1270, 2
    %vm1291 = vcmp.lt.s32.totalorder %v1270, 3
    %vm1292 = vcmp.lt.s32.totalorder %v1270, 4
    %v1293 = vsel %vm1289, %v1273, %v1276
    %v1294 = vsel %vm1292, %v1282, 2102212464
    %v1295 = vsel %vm1291, %v1279, %v1294
    %v1296 = vsel %vm1290, %v1293, %v1295
    %v1297 = vsel %vm1289, %v1276, %v1279
    %v1298 = vsel %vm1292, %v1285, 920167782
    %v1299 = vsel %vm1291, %v1282, %v1298
    %v1300 = vsel %vm1290, %v1297, %v1299
    %v1301 = vsel %vm1289, %v1279, %v1282
    %v1302 = vsel %vm1292, %v1288, 1326507024
    %v1303 = vsel %vm1291, %v1285, %v1302
    %v1304 = vsel %vm1290, %v1301, %v1303
    %v1305 = vshll.u32 %v1265, 8
    %v1306 = vmul.u32.u64.compose %v1305, %v1304
    %v1307 = vextract.low.u32 %v1306
    %v1308 = vextract.high.u32 %v1306
    %v1309 = vmul.u32.u64.compose %v1305, %v1300
    %v1310 = vextract.low.u32 %v1309
    %v1311 = vextract.high.u32 %v1309
    %v1312 = vmul.u32 %v1305, %v1296
    %v1313 = vadd.s32 %v1308, %v1310
    %vm1314 = vc.u32 %v1308, %v1310
    %v1315 = vadd.s32 %v1311, 1
    %v1316 = vsel %vm1314, %v1315, %v1311
    %v1317 = vadd.s32 %v1312, %v1316
    %v1318 = vadd.s32 %v1317, 536870912
    %v1319 = vshrl.u32 %v1318, 30
    %v1320 = vshll.u32 %v1319, 30
    %v1321 = vsub.s32 %v1317, %v1320
    %vm1322 = vcmp.lt.s32.totalorder %v1321, 0
    %v1323 = vsub.s32 0, %v1321
    %v1324 = vsel %vm1322, %v1323, %v1321
    %v1325 = vclz %v1324
    %v1326 = vsub.s32 %v1325, 2
    %vm1327 = vcmp.gt.s32.totalorder 0, %v1326
    %v1328 = vsel %vm1327, 0, %v1326
    %v1329 = vsub.s32 32, %v1328
    %v1330 = vshll.u32 %v1321, %v1328
    %v1331 = vshrl.u32 %v1313, %v1329
    %v1332 = vor.u32 %v1330, %v1331
    %v1333 = vsub.s32 4294967266, %v1328
    %v1334 = vadd.s32 %v1333, 127
    %v1335 = vshll.u32 %v1334, 23
    %v1336 = vor.u32 4788187, %v1335
    %v1337 = vand.u32 2147483647, %v1336
    %v1339 = vcvt.s32.f32 %v1332
    %v1340 = vmul.f32 %v1339, %v1337
    %v1341 = vxor.u32 %v1340, 2147483648
    %v1342 = vsel %vm1259, %v1341, %v1340
    %v1343 = vsub.s32 4, %v1319
    %v1344 = vsel %vm1259, %v1343, %v1319
    %v1345 = vsel %vm1258, %v115, %v1342
    %v1346 = vsel %vm1258, 0, %v1344
    %v1347 = vcosq.f32.pop %v1345
    %v1348 = vsinq.f32.pop %v1345
    %vm1349 = vweird.f32 %v115
    %v1350 = vand.u32 %v1346, 3
    %vm1351 = vcmp.lt.s32.totalorder %v1350, 2
    %vm1352 = vcmp.eq.s32.totalorder %v1350, 0
    %v1353 = vxor.u32 %v1348, 2147483648
    %v1354 = vsel %vm1352, %v1347, %v1353
    %vm1355 = vcmp.eq.s32.totalorder %v1350, 2
    %v1356 = vxor.u32 %v1347, 2147483648
    %v1357 = vsel %vm1355, %v1356, %v1348
    %v1358 = vsel %vm1351, %v1354, %v1357
    %v1359 = vsel %vm1349, nan, %v1358
    %v1360 = vand.u32 2147483647, %v116
    %vm1361 = vcmp.le.f32.partialorder %v1360, 0.7853982
    %vm1362 = vcmp.lt.s32.totalorder %v116, 0
    %v1363 = vand.u32 %v116, 2139095040
    %v1364 = vshrl.u32 %v1363, 23
    %v1365 = vsub.s32 %v1364, 127
    %v1366 = vand.u32 2147483647, %v116
    %v1367 = vand.u32 %v1366, 8388607
    %v1368 = vor.u32 %v1367, 8388608
    %v1369 = vsub.s32 0, %v1368
    %v1370 = vadd.s32 %v1365, 1
    %vm1371 = vcmp.gt.s32.totalorder %v1370, 0
    %v1372 = vsel %vm1371, %v1370, 0
    %v1373 = vshrl.u32 %v1372, 5
    %v1374 = vand.u32 %v1372, 31
    %v1375 = vsub.s32 32, %v1374
    %v1376 = vshrl.u32 683565275, %v1375
    %v1377 = vshll.u32 683565275, %v1374
    %v1378 = vshrl.u32 2475754826, %v1375
    %v1379 = vor.u32 %v1377, %v1378
    %v1380 = vshll.u32 2475754826, %v1374
    %v1381 = vshrl.u32 2131351028, %v1375
    %v1382 = vor.u32 %v1380, %v1381
    %v1383 = vshll.u32 2131351028, %v1374
    %v1384 = vshrl.u32 2102212464, %v1375
    %v1385 = vor.u32 %v1383, %v1384
    %v1386 = vshll.u32 2102212464, %v1374
    %v1387 = vshrl.u32 920167782, %v1375
    %v1388 = vor.u32 %v1386, %v1387
    %v1389 = vshll.u32 920167782, %v1374
    %v1390 = vshrl.u32 1326507024, %v1375
    %v1391 = vor.u32 %v1389, %v1390
    %vm1392 = vcmp.lt.s32.totalorder %v1373, 1
    %vm1393 = vcmp.lt.s32.totalorder %v1373, 2
    %vm1394 = vcmp.lt.s32.totalorder %v1373, 3
    %vm1395 = vcmp.lt.s32.totalorder %v1373, 4
    %v1396 = vsel %vm1392, %v1376, %v1379
    %v1397 = vsel %vm1395, %v1385, 2102212464
    %v1398 = vsel %vm1394, %v1382, %v1397
    %v1399 = vsel %vm1393, %v1396, %v1398
    %v1400 = vsel %vm1392, %v1379, %v1382
    %v1401 = vsel %vm1395, %v1388, 920167782
    %v1402 = vsel %vm1394, %v1385, %v1401
    %v1403 = vsel %vm1393, %v1400, %v1402
    %v1404 = vsel %vm1392, %v1382, %v1385
    %v1405 = vsel %vm1395, %v1391, 1326507024
    %v1406 = vsel %vm1394, %v1388, %v1405
    %v1407 = vsel %vm1393, %v1404, %v1406
    %v1408 = vshll.u32 %v1368, 8
    %v1409 = vmul.u32.u64.compose %v1408, %v1407
    %v1410 = vextract.low.u32 %v1409
    %v1411 = vextract.high.u32 %v1409
    %v1412 = vmul.u32.u64.compose %v1408, %v1403
    %v1413 = vextract.low.u32 %v1412
    %v1414 = vextract.high.u32 %v1412
    %v1415 = vmul.u32 %v1408, %v1399
    %v1416 = vadd.s32 %v1411, %v1413
    %vm1417 = vc.u32 %v1411, %v1413
    %v1418 = vadd.s32 %v1414, 1
    %v1419 = vsel %vm1417, %v1418, %v1414
    %v1420 = vadd.s32 %v1415, %v1419
    %v1421 = vadd.s32 %v1420, 536870912
    %v1422 = vshrl.u32 %v1421, 30
    %v1423 = vshll.u32 %v1422, 30
    %v1424 = vsub.s32 %v1420, %v1423
    %vm1425 = vcmp.lt.s32.totalorder %v1424, 0
    %v1426 = vsub.s32 0, %v1424
    %v1427 = vsel %vm1425, %v1426, %v1424
    %v1428 = vclz %v1427
    %v1429 = vsub.s32 %v1428, 2
    %vm1430 = vcmp.gt.s32.totalorder 0, %v1429
    %v1431 = vsel %vm1430, 0, %v1429
    %v1432 = vsub.s32 32, %v1431
    %v1433 = vshll.u32 %v1424, %v1431
    %v1434 = vshrl.u32 %v1416, %v1432
    %v1435 = vor.u32 %v1433, %v1434
    %v1436 = vsub.s32 4294967266, %v1431
    %v1437 = vadd.s32 %v1436, 127
    %v1438 = vshll.u32 %v1437, 23
    %v1439 = vor.u32 4788187, %v1438
    %v1440 = vand.u32 2147483647, %v1439
    %v1442 = vcvt.s32.f32 %v1435
    %v1443 = vmul.f32 %v1442, %v1440
    %v1444 = vxor.u32 %v1443, 2147483648
    %v1445 = vsel %vm1362, %v1444, %v1443
    %v1446 = vsub.s32 4, %v1422
    %v1447 = vsel %vm1362, %v1446, %v1422
    %v1448 = vsel %vm1361, %v116, %v1445
    %v1449 = vsel %vm1361, 0, %v1447
    %v1450 = vcosq.f32.pop %v1448
    %v1451 = vsinq.f32.pop %v1448
    %vm1452 = vweird.f32 %v116
    %v1453 = vand.u32 %v1449, 3
    %vm1454 = vcmp.lt.s32.totalorder %v1453, 2
    %vm1455 = vcmp.eq.s32.totalorder %v1453, 0
    %v1456 = vxor.u32 %v1451, 2147483648
    %v1457 = vsel %vm1455, %v1450, %v1456
    %vm1458 = vcmp.eq.s32.totalorder %v1453, 2
    %v1459 = vxor.u32 %v1450, 2147483648
    %v1460 = vsel %vm1458, %v1459, %v1451
    %v1461 = vsel %vm1454, %v1457, %v1460
    %v1462 = vsel %vm1452, nan, %v1461
    %v1463 = vand.u32 2147483647, %v117
    %vm1464 = vcmp.le.f32.partialorder %v1463, 0.7853982
    %vm1465 = vcmp.lt.s32.totalorder %v117, 0
    %v1466 = vand.u32 %v117, 2139095040
    %v1467 = vshrl.u32 %v1466, 23
    %v1468 = vsub.s32 %v1467, 127
    %v1469 = vand.u32 2147483647, %v117
    %v1470 = vand.u32 %v1469, 8388607
    %v1471 = vor.u32 %v1470, 8388608
    %v1472 = vsub.s32 0, %v1471
    %v1473 = vadd.s32 %v1468, 1
    %vm1474 = vcmp.gt.s32.totalorder %v1473, 0
    %v1475 = vsel %vm1474, %v1473, 0
    %v1476 = vshrl.u32 %v1475, 5
    %v1477 = vand.u32 %v1475, 31
    %v1478 = vsub.s32 32, %v1477
    %v1479 = vshrl.u32 683565275, %v1478
    %v1480 = vshll.u32 683565275, %v1477
    %v1481 = vshrl.u32 2475754826, %v1478
    %v1482 = vor.u32 %v1480, %v1481
    %v1483 = vshll.u32 2475754826, %v1477
    %v1484 = vshrl.u32 2131351028, %v1478
    %v1485 = vor.u32 %v1483, %v1484
    %v1486 = vshll.u32 2131351028, %v1477
    %v1487 = vshrl.u32 2102212464, %v1478
    %v1488 = vor.u32 %v1486, %v1487
    %v1489 = vshll.u32 2102212464, %v1477
    %v1490 = vshrl.u32 920167782, %v1478
    %v1491 = vor.u32 %v1489, %v1490
    %v1492 = vshll.u32 920167782, %v1477
    %v1493 = vshrl.u32 1326507024, %v1478
    %v1494 = vor.u32 %v1492, %v1493
    %vm1495 = vcmp.lt.s32.totalorder %v1476, 1
    %vm1496 = vcmp.lt.s32.totalorder %v1476, 2
    %vm1497 = vcmp.lt.s32.totalorder %v1476, 3
    %vm1498 = vcmp.lt.s32.totalorder %v1476, 4
    %v1499 = vsel %vm1495, %v1479, %v1482
    %v1500 = vsel %vm1498, %v1488, 2102212464
    %v1501 = vsel %vm1497, %v1485, %v1500
    %v1502 = vsel %vm1496, %v1499, %v1501
    %v1503 = vsel %vm1495, %v1482, %v1485
    %v1504 = vsel %vm1498, %v1491, 920167782
    %v1505 = vsel %vm1497, %v1488, %v1504
    %v1506 = vsel %vm1496, %v1503, %v1505
    %v1507 = vsel %vm1495, %v1485, %v1488
    %v1508 = vsel %vm1498, %v1494, 1326507024
    %v1509 = vsel %vm1497, %v1491, %v1508
    %v1510 = vsel %vm1496, %v1507, %v1509
    %v1511 = vshll.u32 %v1471, 8
    %v1512 = vmul.u32.u64.compose %v1511, %v1510
    %v1513 = vextract.low.u32 %v1512
    %v1514 = vextract.high.u32 %v1512
    %v1515 = vmul.u32.u64.compose %v1511, %v1506
    %v1516 = vextract.low.u32 %v1515
    %v1517 = vextract.high.u32 %v1515
    %v1518 = vmul.u32 %v1511, %v1502
    %v1519 = vadd.s32 %v1514, %v1516
    %vm1520 = vc.u32 %v1514, %v1516
    %v1521 = vadd.s32 %v1517, 1
    %v1522 = vsel %vm1520, %v1521, %v1517
    %v1523 = vadd.s32 %v1518, %v1522
    %v1524 = vadd.s32 %v1523, 536870912
    %v1525 = vshrl.u32 %v1524, 30
    %v1526 = vshll.u32 %v1525, 30
    %v1527 = vsub.s32 %v1523, %v1526
    %vm1528 = vcmp.lt.s32.totalorder %v1527, 0
    %v1529 = vsub.s32 0, %v1527
    %v1530 = vsel %vm1528, %v1529, %v1527
    %v1531 = vclz %v1530
    %v1532 = vsub.s32 %v1531, 2
    %vm1533 = vcmp.gt.s32.totalorder 0, %v1532
    %v1534 = vsel %vm1533, 0, %v1532
    %v1535 = vsub.s32 32, %v1534
    %v1536 = vshll.u32 %v1527, %v1534
    %v1537 = vshrl.u32 %v1519, %v1535
    %v1538 = vor.u32 %v1536, %v1537
    %v1539 = vsub.s32 4294967266, %v1534
    %v1540 = vadd.s32 %v1539, 127
    %v1541 = vshll.u32 %v1540, 23
    %v1542 = vor.u32 4788187, %v1541
    %v1543 = vand.u32 2147483647, %v1542
    %v1545 = vcvt.s32.f32 %v1538
    %v1546 = vmul.f32 %v1545, %v1543
    %v1547 = vxor.u32 %v1546, 2147483648
    %v1548 = vsel %vm1465, %v1547, %v1546
    %v1549 = vsub.s32 4, %v1525
    %v1550 = vsel %vm1465, %v1549, %v1525
    %v1551 = vsel %vm1464, %v117, %v1548
    %v1552 = vsel %vm1464, 0, %v1550
    %v1553 = vcosq.f32.pop %v1551
    %v1554 = vsinq.f32.pop %v1551
    %vm1555 = vweird.f32 %v117
    %v1556 = vand.u32 %v1552, 3
    %vm1557 = vcmp.lt.s32.totalorder %v1556, 2
    %vm1558 = vcmp.eq.s32.totalorder %v1556, 0
    %v1559 = vxor.u32 %v1554, 2147483648
    %v1560 = vsel %vm1558, %v1553, %v1559
    %vm1561 = vcmp.eq.s32.totalorder %v1556, 2
    %v1562 = vxor.u32 %v1553, 2147483648
    %v1563 = vsel %vm1561, %v1562, %v1554
    %v1564 = vsel %vm1557, %v1560, %v1563
    %v1565 = vsel %vm1555, nan, %v1564
    %v1566 = vand.u32 2147483647, %v118
    %vm1567 = vcmp.le.f32.partialorder %v1566, 0.7853982
    %vm1568 = vcmp.lt.s32.totalorder %v118, 0
    %v1569 = vand.u32 %v118, 2139095040
    %v1570 = vshrl.u32 %v1569, 23
    %v1571 = vsub.s32 %v1570, 127
    %v1572 = vand.u32 2147483647, %v118
    %v1573 = vand.u32 %v1572, 8388607
    %v1574 = vor.u32 %v1573, 8388608
    %v1575 = vsub.s32 0, %v1574
    %v1576 = vadd.s32 %v1571, 1
    %vm1577 = vcmp.gt.s32.totalorder %v1576, 0
    %v1578 = vsel %vm1577, %v1576, 0
    %v1579 = vshrl.u32 %v1578, 5
    %v1580 = vand.u32 %v1578, 31
    %v1581 = vsub.s32 32, %v1580
    %v1582 = vshrl.u32 683565275, %v1581
    %v1583 = vshll.u32 683565275, %v1580
    %v1584 = vshrl.u32 2475754826, %v1581
    %v1585 = vor.u32 %v1583, %v1584
    %v1586 = vshll.u32 2475754826, %v1580
    %v1587 = vshrl.u32 2131351028, %v1581
    %v1588 = vor.u32 %v1586, %v1587
    %v1589 = vshll.u32 2131351028, %v1580
    %v1590 = vshrl.u32 2102212464, %v1581
    %v1591 = vor.u32 %v1589, %v1590
    %v1592 = vshll.u32 2102212464, %v1580
    %v1593 = vshrl.u32 920167782, %v1581
    %v1594 = vor.u32 %v1592, %v1593
    %v1595 = vshll.u32 920167782, %v1580
    %v1596 = vshrl.u32 1326507024, %v1581
    %v1597 = vor.u32 %v1595, %v1596
    %vm1598 = vcmp.lt.s32.totalorder %v1579, 1
    %vm1599 = vcmp.lt.s32.totalorder %v1579, 2
    %vm1600 = vcmp.lt.s32.totalorder %v1579, 3
    %vm1601 = vcmp.lt.s32.totalorder %v1579, 4
    %v1602 = vsel %vm1598, %v1582, %v1585
    %v1603 = vsel %vm1601, %v1591, 2102212464
    %v1604 = vsel %vm1600, %v1588, %v1603
    %v1605 = vsel %vm1599, %v1602, %v1604
    %v1606 = vsel %vm1598, %v1585, %v1588
    %v1607 = vsel %vm1601, %v1594, 920167782
    %v1608 = vsel %vm1600, %v1591, %v1607
    %v1609 = vsel %vm1599, %v1606, %v1608
    %v1610 = vsel %vm1598, %v1588, %v1591
    %v1611 = vsel %vm1601, %v1597, 1326507024
    %v1612 = vsel %vm1600, %v1594, %v1611
    %v1613 = vsel %vm1599, %v1610, %v1612
    %v1614 = vshll.u32 %v1574, 8
    %v1615 = vmul.u32.u64.compose %v1614, %v1613
    %v1616 = vextract.low.u32 %v1615
    %v1617 = vextract.high.u32 %v1615
    %v1618 = vmul.u32.u64.compose %v1614, %v1609
    %v1619 = vextract.low.u32 %v1618
    %v1620 = vextract.high.u32 %v1618
    %v1621 = vmul.u32 %v1614, %v1605
    %v1622 = vadd.s32 %v1617, %v1619
    %vm1623 = vc.u32 %v1617, %v1619
    %v1624 = vadd.s32 %v1620, 1
    %v1625 = vsel %vm1623, %v1624, %v1620
    %v1626 = vadd.s32 %v1621, %v1625
    %v1627 = vadd.s32 %v1626, 536870912
    %v1628 = vshrl.u32 %v1627, 30
    %v1629 = vshll.u32 %v1628, 30
    %v1630 = vsub.s32 %v1626, %v1629
    %vm1631 = vcmp.lt.s32.totalorder %v1630, 0
    %v1632 = vsub.s32 0, %v1630
    %v1633 = vsel %vm1631, %v1632, %v1630
    %v1634 = vclz %v1633
    %v1635 = vsub.s32 %v1634, 2
    %vm1636 = vcmp.gt.s32.totalorder 0, %v1635
    %v1637 = vsel %vm1636, 0, %v1635
    %v1638 = vsub.s32 32, %v1637
    %v1639 = vshll.u32 %v1630, %v1637
    %v1640 = vshrl.u32 %v1622, %v1638
    %v1641 = vor.u32 %v1639, %v1640
    %v1642 = vsub.s32 4294967266, %v1637
    %v1643 = vadd.s32 %v1642, 127
    %v1644 = vshll.u32 %v1643, 23
    %v1645 = vor.u32 4788187, %v1644
    %v1646 = vand.u32 2147483647, %v1645
    %v1648 = vcvt.s32.f32 %v1641
    %v1649 = vmul.f32 %v1648, %v1646
    %v1650 = vxor.u32 %v1649, 2147483648
    %v1651 = vsel %vm1568, %v1650, %v1649
    %v1652 = vsub.s32 4, %v1628
    %v1653 = vsel %vm1568, %v1652, %v1628
    %v1654 = vsel %vm1567, %v118, %v1651
    %v1655 = vsel %vm1567, 0, %v1653
    %v1656 = vcosq.f32.pop %v1654
    %v1657 = vsinq.f32.pop %v1654
    %vm1658 = vweird.f32 %v118
    %v1659 = vand.u32 %v1655, 3
    %vm1660 = vcmp.lt.s32.totalorder %v1659, 2
    %vm1661 = vcmp.eq.s32.totalorder %v1659, 0
    %v1662 = vxor.u32 %v1657, 2147483648
    %v1663 = vsel %vm1661, %v1656, %v1662
    %vm1664 = vcmp.eq.s32.totalorder %v1659, 2
    %v1665 = vxor.u32 %v1656, 2147483648
    %v1666 = vsel %vm1664, %v1665, %v1657
    %v1667 = vsel %vm1660, %v1663, %v1666
    %v1668 = vsel %vm1658, nan, %v1667
    %v1669 = vand.u32 2147483647, %v119
    %vm1670 = vcmp.le.f32.partialorder %v1669, 0.7853982
    %vm1671 = vcmp.lt.s32.totalorder %v119, 0
    %v1672 = vand.u32 %v119, 2139095040
    %v1673 = vshrl.u32 %v1672, 23
    %v1674 = vsub.s32 %v1673, 127
    %v1675 = vand.u32 2147483647, %v119
    %v1676 = vand.u32 %v1675, 8388607
    %v1677 = vor.u32 %v1676, 8388608
    %v1678 = vsub.s32 0, %v1677
    %v1679 = vadd.s32 %v1674, 1
    %vm1680 = vcmp.gt.s32.totalorder %v1679, 0
    %v1681 = vsel %vm1680, %v1679, 0
    %v1682 = vshrl.u32 %v1681, 5
    %v1683 = vand.u32 %v1681, 31
    %v1684 = vsub.s32 32, %v1683
    %v1685 = vshrl.u32 683565275, %v1684
    %v1686 = vshll.u32 683565275, %v1683
    %v1687 = vshrl.u32 2475754826, %v1684
    %v1688 = vor.u32 %v1686, %v1687
    %v1689 = vshll.u32 2475754826, %v1683
    %v1690 = vshrl.u32 2131351028, %v1684
    %v1691 = vor.u32 %v1689, %v1690
    %v1692 = vshll.u32 2131351028, %v1683
    %v1693 = vshrl.u32 2102212464, %v1684
    %v1694 = vor.u32 %v1692, %v1693
    %v1695 = vshll.u32 2102212464, %v1683
    %v1696 = vshrl.u32 920167782, %v1684
    %v1697 = vor.u32 %v1695, %v1696
    %v1698 = vshll.u32 920167782, %v1683
    %v1699 = vshrl.u32 1326507024, %v1684
    %v1700 = vor.u32 %v1698, %v1699
    %vm1701 = vcmp.lt.s32.totalorder %v1682, 1
    %vm1702 = vcmp.lt.s32.totalorder %v1682, 2
    %vm1703 = vcmp.lt.s32.totalorder %v1682, 3
    %vm1704 = vcmp.lt.s32.totalorder %v1682, 4
    %v1705 = vsel %vm1701, %v1685, %v1688
    %v1706 = vsel %vm1704, %v1694, 2102212464
    %v1707 = vsel %vm1703, %v1691, %v1706
    %v1708 = vsel %vm1702, %v1705, %v1707
    %v1709 = vsel %vm1701, %v1688, %v1691
    %v1710 = vsel %vm1704, %v1697, 920167782
    %v1711 = vsel %vm1703, %v1694, %v1710
    %v1712 = vsel %vm1702, %v1709, %v1711
    %v1713 = vsel %vm1701, %v1691, %v1694
    %v1714 = vsel %vm1704, %v1700, 1326507024
    %v1715 = vsel %vm1703, %v1697, %v1714
    %v1716 = vsel %vm1702, %v1713, %v1715
    %v1717 = vshll.u32 %v1677, 8
    %v1718 = vmul.u32.u64.compose %v1717, %v1716
    %v1719 = vextract.low.u32 %v1718
    %v1720 = vextract.high.u32 %v1718
    %v1721 = vmul.u32.u64.compose %v1717, %v1712
    %v1722 = vextract.low.u32 %v1721
    %v1723 = vextract.high.u32 %v1721
    %v1724 = vmul.u32 %v1717, %v1708
    %v1725 = vadd.s32 %v1720, %v1722
    %vm1726 = vc.u32 %v1720, %v1722
    %v1727 = vadd.s32 %v1723, 1
    %v1728 = vsel %vm1726, %v1727, %v1723
    %v1729 = vadd.s32 %v1724, %v1728
    %v1730 = vadd.s32 %v1729, 536870912
    %v1731 = vshrl.u32 %v1730, 30
    %v1732 = vshll.u32 %v1731, 30
    %v1733 = vsub.s32 %v1729, %v1732
    %vm1734 = vcmp.lt.s32.totalorder %v1733, 0
    %v1735 = vsub.s32 0, %v1733
    %v1736 = vsel %vm1734, %v1735, %v1733
    %v1737 = vclz %v1736
    %v1738 = vsub.s32 %v1737, 2
    %vm1739 = vcmp.gt.s32.totalorder 0, %v1738
    %v1740 = vsel %vm1739, 0, %v1738
    %v1741 = vsub.s32 32, %v1740
    %v1742 = vshll.u32 %v1733, %v1740
    %v1743 = vshrl.u32 %v1725, %v1741
    %v1744 = vor.u32 %v1742, %v1743
    %v1745 = vsub.s32 4294967266, %v1740
    %v1746 = vadd.s32 %v1745, 127
    %v1747 = vshll.u32 %v1746, 23
    %v1748 = vor.u32 4788187, %v1747
    %v1749 = vand.u32 2147483647, %v1748
    %v1751 = vcvt.s32.f32 %v1744
    %v1752 = vmul.f32 %v1751, %v1749
    %v1753 = vxor.u32 %v1752, 2147483648
    %v1754 = vsel %vm1671, %v1753, %v1752
    %v1755 = vsub.s32 4, %v1731
    %v1756 = vsel %vm1671, %v1755, %v1731
    %v1757 = vsel %vm1670, %v119, %v1754
    %v1758 = vsel %vm1670, 0, %v1756
    %v1759 = vcosq.f32.pop %v1757
    %v1760 = vsinq.f32.pop %v1757
    %vm1761 = vweird.f32 %v119
    %v1762 = vand.u32 %v1758, 3
    %vm1763 = vcmp.lt.s32.totalorder %v1762, 2
    %vm1764 = vcmp.eq.s32.totalorder %v1762, 0
    %v1765 = vxor.u32 %v1760, 2147483648
    %v1766 = vsel %vm1764, %v1759, %v1765
    %vm1767 = vcmp.eq.s32.totalorder %v1762, 2
    %v1768 = vxor.u32 %v1759, 2147483648
    %v1769 = vsel %vm1767, %v1768, %v1760
    %v1770 = vsel %vm1763, %v1766, %v1769
    %v1771 = vsel %vm1761, nan, %v1770
    %v1772 = vand.u32 2147483647, %v120
    %vm1773 = vcmp.le.f32.partialorder %v1772, 0.7853982
    %vm1774 = vcmp.lt.s32.totalorder %v120, 0
    %v1775 = vand.u32 %v120, 2139095040
    %v1776 = vshrl.u32 %v1775, 23
    %v1777 = vsub.s32 %v1776, 127
    %v1778 = vand.u32 2147483647, %v120
    %v1779 = vand.u32 %v1778, 8388607
    %v1780 = vor.u32 %v1779, 8388608
    %v1781 = vsub.s32 0, %v1780
    %v1782 = vadd.s32 %v1777, 1
    %vm1783 = vcmp.gt.s32.totalorder %v1782, 0
    %v1784 = vsel %vm1783, %v1782, 0
    %v1785 = vshrl.u32 %v1784, 5
    %v1786 = vand.u32 %v1784, 31
    %v1787 = vsub.s32 32, %v1786
    %v1788 = vshrl.u32 683565275, %v1787
    %v1789 = vshll.u32 683565275, %v1786
    %v1790 = vshrl.u32 2475754826, %v1787
    %v1791 = vor.u32 %v1789, %v1790
    %v1792 = vshll.u32 2475754826, %v1786
    %v1793 = vshrl.u32 2131351028, %v1787
    %v1794 = vor.u32 %v1792, %v1793
    %v1795 = vshll.u32 2131351028, %v1786
    %v1796 = vshrl.u32 2102212464, %v1787
    %v1797 = vor.u32 %v1795, %v1796
    %v1798 = vshll.u32 2102212464, %v1786
    %v1799 = vshrl.u32 920167782, %v1787
    %v1800 = vor.u32 %v1798, %v1799
    %v1801 = vshll.u32 920167782, %v1786
    %v1802 = vshrl.u32 1326507024, %v1787
    %v1803 = vor.u32 %v1801, %v1802
    %vm1804 = vcmp.lt.s32.totalorder %v1785, 1
    %vm1805 = vcmp.lt.s32.totalorder %v1785, 2
    %vm1806 = vcmp.lt.s32.totalorder %v1785, 3
    %vm1807 = vcmp.lt.s32.totalorder %v1785, 4
    %v1808 = vsel %vm1804, %v1788, %v1791
    %v1809 = vsel %vm1807, %v1797, 2102212464
    %v1810 = vsel %vm1806, %v1794, %v1809
    %v1811 = vsel %vm1805, %v1808, %v1810
    %v1812 = vsel %vm1804, %v1791, %v1794
    %v1813 = vsel %vm1807, %v1800, 920167782
    %v1814 = vsel %vm1806, %v1797, %v1813
    %v1815 = vsel %vm1805, %v1812, %v1814
    %v1816 = vsel %vm1804, %v1794, %v1797
    %v1817 = vsel %vm1807, %v1803, 1326507024
    %v1818 = vsel %vm1806, %v1800, %v1817
    %v1819 = vsel %vm1805, %v1816, %v1818
    %v1820 = vshll.u32 %v1780, 8
    %v1821 = vmul.u32.u64.compose %v1820, %v1819
    %v1822 = vextract.low.u32 %v1821
    %v1823 = vextract.high.u32 %v1821
    %v1824 = vmul.u32.u64.compose %v1820, %v1815
    %v1825 = vextract.low.u32 %v1824
    %v1826 = vextract.high.u32 %v1824
    %v1827 = vmul.u32 %v1820, %v1811
    %v1828 = vadd.s32 %v1823, %v1825
    %vm1829 = vc.u32 %v1823, %v1825
    %v1830 = vadd.s32 %v1826, 1
    %v1831 = vsel %vm1829, %v1830, %v1826
    %v1832 = vadd.s32 %v1827, %v1831
    %v1833 = vadd.s32 %v1832, 536870912
    %v1834 = vshrl.u32 %v1833, 30
    %v1835 = vshll.u32 %v1834, 30
    %v1836 = vsub.s32 %v1832, %v1835
    %vm1837 = vcmp.lt.s32.totalorder %v1836, 0
    %v1838 = vsub.s32 0, %v1836
    %v1839 = vsel %vm1837, %v1838, %v1836
    %v1840 = vclz %v1839
    %v1841 = vsub.s32 %v1840, 2
    %vm1842 = vcmp.gt.s32.totalorder 0, %v1841
    %v1843 = vsel %vm1842, 0, %v1841
    %v1844 = vsub.s32 32, %v1843
    %v1845 = vshll.u32 %v1836, %v1843
    %v1846 = vshrl.u32 %v1828, %v1844
    %v1847 = vor.u32 %v1845, %v1846
    %v1848 = vsub.s32 4294967266, %v1843
    %v1849 = vadd.s32 %v1848, 127
    %v1850 = vshll.u32 %v1849, 23
    %v1851 = vor.u32 4788187, %v1850
    %v1852 = vand.u32 2147483647, %v1851
    %v1854 = vcvt.s32.f32 %v1847
    %v1855 = vmul.f32 %v1854, %v1852
    %v1856 = vxor.u32 %v1855, 2147483648
    %v1857 = vsel %vm1774, %v1856, %v1855
    %v1858 = vsub.s32 4, %v1834
    %v1859 = vsel %vm1774, %v1858, %v1834
    %v1860 = vsel %vm1773, %v120, %v1857
    %v1861 = vsel %vm1773, 0, %v1859
    %v1862 = vcosq.f32.pop %v1860
    %v1863 = vsinq.f32.pop %v1860
    %vm1864 = vweird.f32 %v120
    %v1865 = vand.u32 %v1861, 3
    %vm1866 = vcmp.lt.s32.totalorder %v1865, 2
    %vm1867 = vcmp.eq.s32.totalorder %v1865, 0
    %v1868 = vxor.u32 %v1863, 2147483648
    %v1869 = vsel %vm1867, %v1862, %v1868
    %vm1870 = vcmp.eq.s32.totalorder %v1865, 2
    %v1871 = vxor.u32 %v1862, 2147483648
    %v1872 = vsel %vm1870, %v1871, %v1863
    %v1873 = vsel %vm1866, %v1869, %v1872
    %v1874 = vsel %vm1864, nan, %v1873
    %v1875 = vand.u32 2147483647, %v121
    %vm1876 = vcmp.le.f32.partialorder %v1875, 0.7853982
    %vm1877 = vcmp.lt.s32.totalorder %v121, 0
    %v1878 = vand.u32 %v121, 2139095040
    %v1879 = vshrl.u32 %v1878, 23
    %v1880 = vsub.s32 %v1879, 127
    %v1881 = vand.u32 2147483647, %v121
    %v1882 = vand.u32 %v1881, 8388607
    %v1883 = vor.u32 %v1882, 8388608
    %v1884 = vsub.s32 0, %v1883
    %v1885 = vadd.s32 %v1880, 1
    %vm1886 = vcmp.gt.s32.totalorder %v1885, 0
    %v1887 = vsel %vm1886, %v1885, 0
    %v1888 = vshrl.u32 %v1887, 5
    %v1889 = vand.u32 %v1887, 31
    %v1890 = vsub.s32 32, %v1889
    %v1891 = vshrl.u32 683565275, %v1890
    %v1892 = vshll.u32 683565275, %v1889
    %v1893 = vshrl.u32 2475754826, %v1890
    %v1894 = vor.u32 %v1892, %v1893
    %v1895 = vshll.u32 2475754826, %v1889
    %v1896 = vshrl.u32 2131351028, %v1890
    %v1897 = vor.u32 %v1895, %v1896
    %v1898 = vshll.u32 2131351028, %v1889
    %v1899 = vshrl.u32 2102212464, %v1890
    %v1900 = vor.u32 %v1898, %v1899
    %v1901 = vshll.u32 2102212464, %v1889
    %v1902 = vshrl.u32 920167782, %v1890
    %v1903 = vor.u32 %v1901, %v1902
    %v1904 = vshll.u32 920167782, %v1889
    %v1905 = vshrl.u32 1326507024, %v1890
    %v1906 = vor.u32 %v1904, %v1905
    %vm1907 = vcmp.lt.s32.totalorder %v1888, 1
    %vm1908 = vcmp.lt.s32.totalorder %v1888, 2
    %vm1909 = vcmp.lt.s32.totalorder %v1888, 3
    %vm1910 = vcmp.lt.s32.totalorder %v1888, 4
    %v1911 = vsel %vm1907, %v1891, %v1894
    %v1912 = vsel %vm1910, %v1900, 2102212464
    %v1913 = vsel %vm1909, %v1897, %v1912
    %v1914 = vsel %vm1908, %v1911, %v1913
    %v1915 = vsel %vm1907, %v1894, %v1897
    %v1916 = vsel %vm1910, %v1903, 920167782
    %v1917 = vsel %vm1909, %v1900, %v1916
    %v1918 = vsel %vm1908, %v1915, %v1917
    %v1919 = vsel %vm1907, %v1897, %v1900
    %v1920 = vsel %vm1910, %v1906, 1326507024
    %v1921 = vsel %vm1909, %v1903, %v1920
    %v1922 = vsel %vm1908, %v1919, %v1921
    %v1923 = vshll.u32 %v1883, 8
    %v1924 = vmul.u32.u64.compose %v1923, %v1922
    %v1925 = vextract.low.u32 %v1924
    %v1926 = vextract.high.u32 %v1924
    %v1927 = vmul.u32.u64.compose %v1923, %v1918
    %v1928 = vextract.low.u32 %v1927
    %v1929 = vextract.high.u32 %v1927
    %v1930 = vmul.u32 %v1923, %v1914
    %v1931 = vadd.s32 %v1926, %v1928
    %vm1932 = vc.u32 %v1926, %v1928
    %v1933 = vadd.s32 %v1929, 1
    %v1934 = vsel %vm1932, %v1933, %v1929
    %v1935 = vadd.s32 %v1930, %v1934
    %v1936 = vadd.s32 %v1935, 536870912
    %v1937 = vshrl.u32 %v1936, 30
    %v1938 = vshll.u32 %v1937, 30
    %v1939 = vsub.s32 %v1935, %v1938
    %vm1940 = vcmp.lt.s32.totalorder %v1939, 0
    %v1941 = vsub.s32 0, %v1939
    %v1942 = vsel %vm1940, %v1941, %v1939
    %v1943 = vclz %v1942
    %v1944 = vsub.s32 %v1943, 2
    %vm1945 = vcmp.gt.s32.totalorder 0, %v1944
    %v1946 = vsel %vm1945, 0, %v1944
    %v1947 = vsub.s32 32, %v1946
    %v1948 = vshll.u32 %v1939, %v1946
    %v1949 = vshrl.u32 %v1931, %v1947
    %v1950 = vor.u32 %v1948, %v1949
    %v1951 = vsub.s32 4294967266, %v1946
    %v1952 = vadd.s32 %v1951, 127
    %v1953 = vshll.u32 %v1952, 23
    %v1954 = vor.u32 4788187, %v1953
    %v1955 = vand.u32 2147483647, %v1954
    %v1957 = vcvt.s32.f32 %v1950
    %v1958 = vmul.f32 %v1957, %v1955
    %v1959 = vxor.u32 %v1958, 2147483648
    %v1960 = vsel %vm1877, %v1959, %v1958
    %v1961 = vsub.s32 4, %v1937
    %v1962 = vsel %vm1877, %v1961, %v1937
    %v1963 = vsel %vm1876, %v121, %v1960
    %v1964 = vsel %vm1876, 0, %v1962
    %v1965 = vcosq.f32.pop %v1963
    %v1966 = vsinq.f32.pop %v1963
    %vm1967 = vweird.f32 %v121
    %v1968 = vand.u32 %v1964, 3
    %vm1969 = vcmp.lt.s32.totalorder %v1968, 2
    %vm1970 = vcmp.eq.s32.totalorder %v1968, 0
    %v1971 = vxor.u32 %v1966, 2147483648
    %v1972 = vsel %vm1970, %v1965, %v1971
    %vm1973 = vcmp.eq.s32.totalorder %v1968, 2
    %v1974 = vxor.u32 %v1965, 2147483648
    %v1975 = vsel %vm1973, %v1974, %v1966
    %v1976 = vsel %vm1969, %v1972, %v1975
    %v1977 = vsel %vm1967, nan, %v1976
    %v1978 = vand.u32 2147483647, %v122
    %vm1979 = vcmp.le.f32.partialorder %v1978, 0.7853982
    %vm1980 = vcmp.lt.s32.totalorder %v122, 0
    %v1981 = vand.u32 %v122, 2139095040
    %v1982 = vshrl.u32 %v1981, 23
    %v1983 = vsub.s32 %v1982, 127
    %v1984 = vand.u32 2147483647, %v122
    %v1985 = vand.u32 %v1984, 8388607
    %v1986 = vor.u32 %v1985, 8388608
    %v1987 = vsub.s32 0, %v1986
    %v1988 = vadd.s32 %v1983, 1
    %vm1989 = vcmp.gt.s32.totalorder %v1988, 0
    %v1990 = vsel %vm1989, %v1988, 0
    %v1991 = vshrl.u32 %v1990, 5
    %v1992 = vand.u32 %v1990, 31
    %v1993 = vsub.s32 32, %v1992
    %v1994 = vshrl.u32 683565275, %v1993
    %v1995 = vshll.u32 683565275, %v1992
    %v1996 = vshrl.u32 2475754826, %v1993
    %v1997 = vor.u32 %v1995, %v1996
    %v1998 = vshll.u32 2475754826, %v1992
    %v1999 = vshrl.u32 2131351028, %v1993
    %v2000 = vor.u32 %v1998, %v1999
    %v2001 = vshll.u32 2131351028, %v1992
    %v2002 = vshrl.u32 2102212464, %v1993
    %v2003 = vor.u32 %v2001, %v2002
    %v2004 = vshll.u32 2102212464, %v1992
    %v2005 = vshrl.u32 920167782, %v1993
    %v2006 = vor.u32 %v2004, %v2005
    %v2007 = vshll.u32 920167782, %v1992
    %v2008 = vshrl.u32 1326507024, %v1993
    %v2009 = vor.u32 %v2007, %v2008
    %vm2010 = vcmp.lt.s32.totalorder %v1991, 1
    %vm2011 = vcmp.lt.s32.totalorder %v1991, 2
    %vm2012 = vcmp.lt.s32.totalorder %v1991, 3
    %vm2013 = vcmp.lt.s32.totalorder %v1991, 4
    %v2014 = vsel %vm2010, %v1994, %v1997
    %v2015 = vsel %vm2013, %v2003, 2102212464
    %v2016 = vsel %vm2012, %v2000, %v2015
    %v2017 = vsel %vm2011, %v2014, %v2016
    %v2018 = vsel %vm2010, %v1997, %v2000
    %v2019 = vsel %vm2013, %v2006, 920167782
    %v2020 = vsel %vm2012, %v2003, %v2019
    %v2021 = vsel %vm2011, %v2018, %v2020
    %v2022 = vsel %vm2010, %v2000, %v2003
    %v2023 = vsel %vm2013, %v2009, 1326507024
    %v2024 = vsel %vm2012, %v2006, %v2023
    %v2025 = vsel %vm2011, %v2022, %v2024
    %v2026 = vshll.u32 %v1986, 8
    %v2027 = vmul.u32.u64.compose %v2026, %v2025
    %v2028 = vextract.low.u32 %v2027
    %v2029 = vextract.high.u32 %v2027
    %v2030 = vmul.u32.u64.compose %v2026, %v2021
    %v2031 = vextract.low.u32 %v2030
    %v2032 = vextract.high.u32 %v2030
    %v2033 = vmul.u32 %v2026, %v2017
    %v2034 = vadd.s32 %v2029, %v2031
    %vm2035 = vc.u32 %v2029, %v2031
    %v2036 = vadd.s32 %v2032, 1
    %v2037 = vsel %vm2035, %v2036, %v2032
    %v2038 = vadd.s32 %v2033, %v2037
    %v2039 = vadd.s32 %v2038, 536870912
    %v2040 = vshrl.u32 %v2039, 30
    %v2041 = vshll.u32 %v2040, 30
    %v2042 = vsub.s32 %v2038, %v2041
    %vm2043 = vcmp.lt.s32.totalorder %v2042, 0
    %v2044 = vsub.s32 0, %v2042
    %v2045 = vsel %vm2043, %v2044, %v2042
    %v2046 = vclz %v2045
    %v2047 = vsub.s32 %v2046, 2
    %vm2048 = vcmp.gt.s32.totalorder 0, %v2047
    %v2049 = vsel %vm2048, 0, %v2047
    %v2050 = vsub.s32 32, %v2049
    %v2051 = vshll.u32 %v2042, %v2049
    %v2052 = vshrl.u32 %v2034, %v2050
    %v2053 = vor.u32 %v2051, %v2052
    %v2054 = vsub.s32 4294967266, %v2049
    %v2055 = vadd.s32 %v2054, 127
    %v2056 = vshll.u32 %v2055, 23
    %v2057 = vor.u32 4788187, %v2056
    %v2058 = vand.u32 2147483647, %v2057
    %v2060 = vcvt.s32.f32 %v2053
    %v2061 = vmul.f32 %v2060, %v2058
    %v2062 = vxor.u32 %v2061, 2147483648
    %v2063 = vsel %vm1980, %v2062, %v2061
    %v2064 = vsub.s32 4, %v2040
    %v2065 = vsel %vm1980, %v2064, %v2040
    %v2066 = vsel %vm1979, %v122, %v2063
    %v2067 = vsel %vm1979, 0, %v2065
    %v2068 = vcosq.f32.pop %v2066
    %v2069 = vsinq.f32.pop %v2066
    %vm2070 = vweird.f32 %v122
    %v2071 = vand.u32 %v2067, 3
    %vm2072 = vcmp.lt.s32.totalorder %v2071, 2
    %vm2073 = vcmp.eq.s32.totalorder %v2071, 0
    %v2074 = vxor.u32 %v2069, 2147483648
    %v2075 = vsel %vm2073, %v2068, %v2074
    %vm2076 = vcmp.eq.s32.totalorder %v2071, 2
    %v2077 = vxor.u32 %v2068, 2147483648
    %v2078 = vsel %vm2076, %v2077, %v2069
    %v2079 = vsel %vm2072, %v2075, %v2078
    %v2080 = vsel %vm2070, nan, %v2079
    %v2081 = vand.u32 2147483647, %v123
    %vm2082 = vcmp.le.f32.partialorder %v2081, 0.7853982
    %vm2083 = vcmp.lt.s32.totalorder %v123, 0
    %v2084 = vand.u32 %v123, 2139095040
    %v2085 = vshrl.u32 %v2084, 23
    %v2086 = vsub.s32 %v2085, 127
    %v2087 = vand.u32 2147483647, %v123
    %v2088 = vand.u32 %v2087, 8388607
    %v2089 = vor.u32 %v2088, 8388608
    %v2090 = vsub.s32 0, %v2089
    %v2091 = vadd.s32 %v2086, 1
    %vm2092 = vcmp.gt.s32.totalorder %v2091, 0
    %v2093 = vsel %vm2092, %v2091, 0
    %v2094 = vshrl.u32 %v2093, 5
    %v2095 = vand.u32 %v2093, 31
    %v2096 = vsub.s32 32, %v2095
    %v2097 = vshrl.u32 683565275, %v2096
    %v2098 = vshll.u32 683565275, %v2095
    %v2099 = vshrl.u32 2475754826, %v2096
    %v2100 = vor.u32 %v2098, %v2099
    %v2101 = vshll.u32 2475754826, %v2095
    %v2102 = vshrl.u32 2131351028, %v2096
    %v2103 = vor.u32 %v2101, %v2102
    %v2104 = vshll.u32 2131351028, %v2095
    %v2105 = vshrl.u32 2102212464, %v2096
    %v2106 = vor.u32 %v2104, %v2105
    %v2107 = vshll.u32 2102212464, %v2095
    %v2108 = vshrl.u32 920167782, %v2096
    %v2109 = vor.u32 %v2107, %v2108
    %v2110 = vshll.u32 920167782, %v2095
    %v2111 = vshrl.u32 1326507024, %v2096
    %v2112 = vor.u32 %v2110, %v2111
    %vm2113 = vcmp.lt.s32.totalorder %v2094, 1
    %vm2114 = vcmp.lt.s32.totalorder %v2094, 2
    %vm2115 = vcmp.lt.s32.totalorder %v2094, 3
    %vm2116 = vcmp.lt.s32.totalorder %v2094, 4
    %v2117 = vsel %vm2113, %v2097, %v2100
    %v2118 = vsel %vm2116, %v2106, 2102212464
    %v2119 = vsel %vm2115, %v2103, %v2118
    %v2120 = vsel %vm2114, %v2117, %v2119
    %v2121 = vsel %vm2113, %v2100, %v2103
    %v2122 = vsel %vm2116, %v2109, 920167782
    %v2123 = vsel %vm2115, %v2106, %v2122
    %v2124 = vsel %vm2114, %v2121, %v2123
    %v2125 = vsel %vm2113, %v2103, %v2106
    %v2126 = vsel %vm2116, %v2112, 1326507024
    %v2127 = vsel %vm2115, %v2109, %v2126
    %v2128 = vsel %vm2114, %v2125, %v2127
    %v2129 = vshll.u32 %v2089, 8
    %v2130 = vmul.u32.u64.compose %v2129, %v2128
    %v2131 = vextract.low.u32 %v2130
    %v2132 = vextract.high.u32 %v2130
    %v2133 = vmul.u32.u64.compose %v2129, %v2124
    %v2134 = vextract.low.u32 %v2133
    %v2135 = vextract.high.u32 %v2133
    %v2136 = vmul.u32 %v2129, %v2120
    %v2137 = vadd.s32 %v2132, %v2134
    %vm2138 = vc.u32 %v2132, %v2134
    %v2139 = vadd.s32 %v2135, 1
    %v2140 = vsel %vm2138, %v2139, %v2135
    %v2141 = vadd.s32 %v2136, %v2140
    %v2142 = vadd.s32 %v2141, 536870912
    %v2143 = vshrl.u32 %v2142, 30
    %v2144 = vshll.u32 %v2143, 30
    %v2145 = vsub.s32 %v2141, %v2144
    %vm2146 = vcmp.lt.s32.totalorder %v2145, 0
    %v2147 = vsub.s32 0, %v2145
    %v2148 = vsel %vm2146, %v2147, %v2145
    %v2149 = vclz %v2148
    %v2150 = vsub.s32 %v2149, 2
    %vm2151 = vcmp.gt.s32.totalorder 0, %v2150
    %v2152 = vsel %vm2151, 0, %v2150
    %v2153 = vsub.s32 32, %v2152
    %v2154 = vshll.u32 %v2145, %v2152
    %v2155 = vshrl.u32 %v2137, %v2153
    %v2156 = vor.u32 %v2154, %v2155
    %v2157 = vsub.s32 4294967266, %v2152
    %v2158 = vadd.s32 %v2157, 127
    %v2159 = vshll.u32 %v2158, 23
    %v2160 = vor.u32 4788187, %v2159
    %v2161 = vand.u32 2147483647, %v2160
    %v2163 = vcvt.s32.f32 %v2156
    %v2164 = vmul.f32 %v2163, %v2161
    %v2165 = vxor.u32 %v2164, 2147483648
    %v2166 = vsel %vm2083, %v2165, %v2164
    %v2167 = vsub.s32 4, %v2143
    %v2168 = vsel %vm2083, %v2167, %v2143
    %v2169 = vsel %vm2082, %v123, %v2166
    %v2170 = vsel %vm2082, 0, %v2168
    %v2171 = vcosq.f32.pop %v2169
    %v2172 = vsinq.f32.pop %v2169
    %vm2173 = vweird.f32 %v123
    %v2174 = vand.u32 %v2170, 3
    %vm2175 = vcmp.lt.s32.totalorder %v2174, 2
    %vm2176 = vcmp.eq.s32.totalorder %v2174, 0
    %v2177 = vxor.u32 %v2172, 2147483648
    %v2178 = vsel %vm2176, %v2171, %v2177
    %vm2179 = vcmp.eq.s32.totalorder %v2174, 2
    %v2180 = vxor.u32 %v2171, 2147483648
    %v2181 = vsel %vm2179, %v2180, %v2172
    %v2182 = vsel %vm2175, %v2178, %v2181
    %v2183 = vsel %vm2173, nan, %v2182
    %v2184 = vsub.f32 1.0, %v226
    %v2185 = vsub.f32 1.0, %v329
    %v2186 = vsub.f32 1.0, %v432
    %v2187 = vsub.f32 1.0, %v535
    %v2188 = vsub.f32 1.0, %v638
    %v2189 = vsub.f32 1.0, %v741
    %v2190 = vsub.f32 1.0, %v844
    %v2191 = vsub.f32 1.0, %v947
    %v2192 = vsub.f32 1.0, %v1050
    %v2193 = vsub.f32 1.0, %v1153
    %v2194 = vsub.f32 1.0, %v1256
    %v2195 = vsub.f32 1.0, %v1359
    %v2196 = vsub.f32 1.0, %v1462
    %v2197 = vsub.f32 1.0, %v1565
    %v2198 = vsub.f32 1.0, %v1668
    %v2199 = vsub.f32 1.0, %v1771
    %v2200 = vsub.f32 1.0, %v1874
    %v2201 = vsub.f32 1.0, %v1977
    %v2202 = vsub.f32 1.0, %v2080
    %v2203 = vsub.f32 1.0, %v2183
    %v2204 = vlaneseq
    %v2205 = vshrl.u32 %v2204, 7
    %s2206 = smul.u32 0, 8
    %v2207 = vstv %s2206
    %v2208 = vadd.s32 %v2205, %v2207
    %vm2209 = vcmp.lt.s32.totalorder %v2208, 2
    %v2210 = vsel %vm2209, 1, 0
    %vm2211 = vcmp.eq.s32.totalorder %v2210, 1
    %v2232 = vcombine.low %v2184, %v2189
    %v2233 = vcombine.high %v2184, %v2189
    %v2234 = vcombine.low %v2194, %v2199
    %v2235 = vcombine.high %v2194, %v2199
    %v2237 = vunpack.c.l.s4 1983009808
    %v2238 = vunpack.c.0.s8 %v2237
    %v2239 = vlaneseq
    %v2240 = vshrl.u32 %v2239, 7
    %v2241 = vsub.s32 %v2238, %v2240
    %v2242 = vrot.slane %v2232, %v2241
    %v2244 = vunpack.c.l.s4 1983009808
    %v2245 = vunpack.c.0.s8 %v2244
    %v2246 = vlaneseq
    %v2247 = vshrl.u32 %v2246, 7
    %v2248 = vsub.s32 %v2245, %v2247
    %v2249 = vrot.slane %v2233, %v2248
    %v2251 = vunpack.c.l.s4 1983009808
    %v2252 = vunpack.c.0.s8 %v2251
    %v2253 = vlaneseq
    %v2254 = vshrl.u32 %v2253, 7
    %v2255 = vsub.s32 %v2252, %v2254
    %v2256 = vrot.slane %v2234, %v2255
    %v2258 = vunpack.c.l.s4 1983009808
    %v2259 = vunpack.c.0.s8 %v2258
    %v2260 = vlaneseq
    %v2261 = vshrl.u32 %v2260, 7
    %v2262 = vsub.s32 %v2259, %v2261
    %v2263 = vrot.slane %v2235, %v2262
    %v2264 = vcombine.low %v2242, %v2256
    %v2265 = vcombine.high %v2242, %v2256
    %v2266 = vcombine.low %v2249, %v2263
    %v2267 = vcombine.high %v2249, %v2263
    %v2268 = vcombine.low %v2185, %v2190
    %v2269 = vcombine.high %v2185, %v2190
    %v2270 = vcombine.low %v2195, %v2200
    %v2271 = vcombine.high %v2195, %v2200
    %v2273 = vunpack.c.l.s4 1983009808
    %v2274 = vunpack.c.0.s8 %v2273
    %v2275 = vlaneseq
    %v2276 = vshrl.u32 %v2275, 7
    %v2277 = vsub.s32 %v2274, %v2276
    %v2278 = vrot.slane %v2268, %v2277
    %v2280 = vunpack.c.l.s4 1983009808
    %v2281 = vunpack.c.0.s8 %v2280
    %v2282 = vlaneseq
    %v2283 = vshrl.u32 %v2282, 7
    %v2284 = vsub.s32 %v2281, %v2283
    %v2285 = vrot.slane %v2269, %v2284
    %v2287 = vunpack.c.l.s4 1983009808
    %v2288 = vunpack.c.0.s8 %v2287
    %v2289 = vlaneseq
    %v2290 = vshrl.u32 %v2289, 7
    %v2291 = vsub.s32 %v2288, %v2290
    %v2292 = vrot.slane %v2270, %v2291
    %v2294 = vunpack.c.l.s4 1983009808
    %v2295 = vunpack.c.0.s8 %v2294
    %v2296 = vlaneseq
    %v2297 = vshrl.u32 %v2296, 7
    %v2298 = vsub.s32 %v2295, %v2297
    %v2299 = vrot.slane %v2271, %v2298
    %v2300 = vcombine.low %v2278, %v2292
    %v2301 = vcombine.high %v2278, %v2292
    %v2302 = vcombine.low %v2285, %v2299
    %v2303 = vcombine.high %v2285, %v2299
    %v2304 = vcombine.low %v2186, %v2191
    %v2305 = vcombine.high %v2186, %v2191
    %v2306 = vcombine.low %v2196, %v2201
    %v2307 = vcombine.high %v2196, %v2201
    %v2309 = vunpack.c.l.s4 1983009808
    %v2310 = vunpack.c.0.s8 %v2309
    %v2311 = vlaneseq
    %v2312 = vshrl.u32 %v2311, 7
    %v2313 = vsub.s32 %v2310, %v2312
    %v2314 = vrot.slane %v2304, %v2313
    %v2316 = vunpack.c.l.s4 1983009808
    %v2317 = vunpack.c.0.s8 %v2316
    %v2318 = vlaneseq
    %v2319 = vshrl.u32 %v2318, 7
    %v2320 = vsub.s32 %v2317, %v2319
    %v2321 = vrot.slane %v2305, %v2320
    %v2323 = vunpack.c.l.s4 1983009808
    %v2324 = vunpack.c.0.s8 %v2323
    %v2325 = vlaneseq
    %v2326 = vshrl.u32 %v2325, 7
    %v2327 = vsub.s32 %v2324, %v2326
    %v2328 = vrot.slane %v2306, %v2327
    %v2330 = vunpack.c.l.s4 1983009808
    %v2331 = vunpack.c.0.s8 %v2330
    %v2332 = vlaneseq
    %v2333 = vshrl.u32 %v2332, 7
    %v2334 = vsub.s32 %v2331, %v2333
    %v2335 = vrot.slane %v2307, %v2334
    %v2336 = vcombine.low %v2314, %v2328
    %v2337 = vcombine.high %v2314, %v2328
    %v2338 = vcombine.low %v2321, %v2335
    %v2339 = vcombine.high %v2321, %v2335
    %v2340 = vcombine.low %v2187, %v2192
    %v2341 = vcombine.high %v2187, %v2192
    %v2342 = vcombine.low %v2197, %v2202
    %v2343 = vcombine.high %v2197, %v2202
    %v2345 = vunpack.c.l.s4 1983009808
    %v2346 = vunpack.c.0.s8 %v2345
    %v2347 = vlaneseq
    %v2348 = vshrl.u32 %v2347, 7
    %v2349 = vsub.s32 %v2346, %v2348
    %v2350 = vrot.slane %v2340, %v2349
    %v2352 = vunpack.c.l.s4 1983009808
    %v2353 = vunpack.c.0.s8 %v2352
    %v2354 = vlaneseq
    %v2355 = vshrl.u32 %v2354, 7
    %v2356 = vsub.s32 %v2353, %v2355
    %v2357 = vrot.slane %v2341, %v2356
    %v2359 = vunpack.c.l.s4 1983009808
    %v2360 = vunpack.c.0.s8 %v2359
    %v2361 = vlaneseq
    %v2362 = vshrl.u32 %v2361, 7
    %v2363 = vsub.s32 %v2360, %v2362
    %v2364 = vrot.slane %v2342, %v2363
    %v2366 = vunpack.c.l.s4 1983009808
    %v2367 = vunpack.c.0.s8 %v2366
    %v2368 = vlaneseq
    %v2369 = vshrl.u32 %v2368, 7
    %v2370 = vsub.s32 %v2367, %v2369
    %v2371 = vrot.slane %v2343, %v2370
    %v2372 = vcombine.low %v2350, %v2364
    %v2373 = vcombine.high %v2350, %v2364
    %v2374 = vcombine.low %v2357, %v2371
    %v2375 = vcombine.high %v2357, %v2371
    %v2376 = vcombine.low %v2188, %v2193
    %v2377 = vcombine.high %v2188, %v2193
    %v2378 = vcombine.low %v2198, %v2203
    %v2379 = vcombine.high %v2198, %v2203
    %v2381 = vunpack.c.l.s4 1983009808
    %v2382 = vunpack.c.0.s8 %v2381
    %v2383 = vlaneseq
    %v2384 = vshrl.u32 %v2383, 7
    %v2385 = vsub.s32 %v2382, %v2384
    %v2386 = vrot.slane %v2376, %v2385
    %v2388 = vunpack.c.l.s4 1983009808
    %v2389 = vunpack.c.0.s8 %v2388
    %v2390 = vlaneseq
    %v2391 = vshrl.u32 %v2390, 7
    %v2392 = vsub.s32 %v2389, %v2391
    %v2393 = vrot.slane %v2377, %v2392
    %v2395 = vunpack.c.l.s4 1983009808
    %v2396 = vunpack.c.0.s8 %v2395
    %v2397 = vlaneseq
    %v2398 = vshrl.u32 %v2397, 7
    %v2399 = vsub.s32 %v2396, %v2398
    %v2400 = vrot.slane %v2378, %v2399
    %v2402 = vunpack.c.l.s4 1983009808
    %v2403 = vunpack.c.0.s8 %v2402
    %v2404 = vlaneseq
    %v2405 = vshrl.u32 %v2404, 7
    %v2406 = vsub.s32 %v2403, %v2405
    %v2407 = vrot.slane %v2379, %v2406
    %v2408 = vcombine.low %v2386, %v2400
    %v2409 = vcombine.high %v2386, %v2400
    %v2410 = vcombine.low %v2393, %v2407
    %v2411 = vcombine.high %v2393, %v2407
    %v2432 = vsel %vm2211, %v2264, 0.0
    %v2433 = vsel %vm2211, %v2265, 0.0
    %v2434 = vsel %vm2211, %v2266, 0.0
    %v2435 = vsel %vm2211, %v2267, 0.0
    %v2436 = vsel %vm2211, %v2300, 0.0
    %v2437 = vsel %vm2211, %v2301, 0.0
    %v2438 = vsel %vm2211, %v2302, 0.0
    %v2439 = vsel %vm2211, %v2303, 0.0
    %v2440 = vsel %vm2211, %v2336, 0.0
    %v2441 = vsel %vm2211, %v2337, 0.0
    %v2442 = vsel %vm2211, %v2338, 0.0
    %v2443 = vsel %vm2211, %v2339, 0.0
    %v2444 = vsel %vm2211, %v2372, 0.0
    %v2445 = vsel %vm2211, %v2373, 0.0
    %v2446 = vsel %vm2211, %v2374, 0.0
    %v2447 = vsel %vm2211, %v2375, 0.0
    %v2448 = vsel %vm2211, %v2408, 0.0
    %v2449 = vsel %vm2211, %v2409, 0.0
    %v2450 = vsel %vm2211, %v2410, 0.0
    %v2451 = vsel %vm2211, %v2411, 0.0
    %v2452 = vsel %vm2211, %v2264, inf
    %v2453 = vsel %vm2211, %v2265, inf
    %v2454 = vsel %vm2211, %v2266, inf
    %v2455 = vsel %vm2211, %v2267, inf
    %v2456 = vsel %vm2211, %v2300, inf
    %v2457 = vsel %vm2211, %v2301, inf
    %v2458 = vsel %vm2211, %v2302, inf
    %v2459 = vsel %vm2211, %v2303, inf
    %v2460 = vsel %vm2211, %v2336, inf
    %v2461 = vsel %vm2211, %v2337, inf
    %v2462 = vsel %vm2211, %v2338, inf
    %v2463 = vsel %vm2211, %v2339, inf
    %v2464 = vsel %vm2211, %v2372, inf
    %v2465 = vsel %vm2211, %v2373, inf
    %v2466 = vsel %vm2211, %v2374, inf
    %v2467 = vsel %vm2211, %v2375, inf
    %v2468 = vsel %vm2211, %v2408, inf
    %v2469 = vsel %vm2211, %v2409, inf
    %v2470 = vsel %vm2211, %v2410, inf
    %v2471 = vsel %vm2211, %v2411, inf
    %v2472 = vsel %vm2211, %v2264, -inf
    %v2473 = vsel %vm2211, %v2265, -inf
    %v2474 = vsel %vm2211, %v2266, -inf
    %v2475 = vsel %vm2211, %v2267, -inf
    %v2476 = vsel %vm2211, %v2300, -inf
    %v2477 = vsel %vm2211, %v2301, -inf
    %v2478 = vsel %vm2211, %v2302, -inf
    %v2479 = vsel %vm2211, %v2303, -inf
    %v2480 = vsel %vm2211, %v2336, -inf
    %v2481 = vsel %vm2211, %v2337, -inf
    %v2482 = vsel %vm2211, %v2338, -inf
    %v2483 = vsel %vm2211, %v2339, -inf
    %v2484 = vsel %vm2211, %v2372, -inf
    %v2485 = vsel %vm2211, %v2373, -inf
    %v2486 = vsel %vm2211, %v2374, -inf
    %v2487 = vsel %vm2211, %v2375, -inf
    %v2488 = vsel %vm2211, %v2408, -inf
    %v2489 = vsel %vm2211, %v2409, -inf
    %v2490 = vsel %vm2211, %v2410, -inf
    %v2491 = vsel %vm2211, %v2411, -inf
    %v2492 = vrot.slane %v2432, 4
    %v2493 = vadd.f32 %v2432, %v2492
    %v2494 = vrot.slane %v2493, 2
    %v2495 = vadd.f32 %v2493, %v2494
    %v2496 = vrot.slane %v2495, 1
    %v2497 = vadd.f32 %v2495, %v2496
    %v2498 = vrot.slane %v2433, 4
    %v2499 = vadd.f32 %v2433, %v2498
    %v2500 = vrot.slane %v2499, 2
    %v2501 = vadd.f32 %v2499, %v2500
    %v2502 = vrot.slane %v2501, 1
    %v2503 = vadd.f32 %v2501, %v2502
    %v2504 = vrot.slane %v2434, 4
    %v2505 = vadd.f32 %v2434, %v2504
    %v2506 = vrot.slane %v2505, 2
    %v2507 = vadd.f32 %v2505, %v2506
    %v2508 = vrot.slane %v2507, 1
    %v2509 = vadd.f32 %v2507, %v2508
    %v2510 = vrot.slane %v2435, 4
    %v2511 = vadd.f32 %v2435, %v2510
    %v2512 = vrot.slane %v2511, 2
    %v2513 = vadd.f32 %v2511, %v2512
    %v2514 = vrot.slane %v2513, 1
    %v2515 = vadd.f32 %v2513, %v2514
    %v2516 = vrot.slane %v2436, 4
    %v2517 = vadd.f32 %v2436, %v2516
    %v2518 = vrot.slane %v2517, 2
    %v2519 = vadd.f32 %v2517, %v2518
    %v2520 = vrot.slane %v2519, 1
    %v2521 = vadd.f32 %v2519, %v2520
    %v2522 = vrot.slane %v2437, 4
    %v2523 = vadd.f32 %v2437, %v2522
    %v2524 = vrot.slane %v2523, 2
    %v2525 = vadd.f32 %v2523, %v2524
    %v2526 = vrot.slane %v2525, 1
    %v2527 = vadd.f32 %v2525, %v2526
    %v2528 = vrot.slane %v2438, 4
    %v2529 = vadd.f32 %v2438, %v2528
    %v2530 = vrot.slane %v2529, 2
    %v2531 = vadd.f32 %v2529, %v2530
    %v2532 = vrot.slane %v2531, 1
    %v2533 = vadd.f32 %v2531, %v2532
    %v2534 = vrot.slane %v2439, 4
    %v2535 = vadd.f32 %v2439, %v2534
    %v2536 = vrot.slane %v2535, 2
    %v2537 = vadd.f32 %v2535, %v2536
    %v2538 = vrot.slane %v2537, 1
    %v2539 = vadd.f32 %v2537, %v2538
    %v2540 = vrot.slane %v2440, 4
    %v2541 = vadd.f32 %v2440, %v2540
    %v2542 = vrot.slane %v2541, 2
    %v2543 = vadd.f32 %v2541, %v2542
    %v2544 = vrot.slane %v2543, 1
    %v2545 = vadd.f32 %v2543, %v2544
    %v2546 = vrot.slane %v2441, 4
    %v2547 = vadd.f32 %v2441, %v2546
    %v2548 = vrot.slane %v2547, 2
    %v2549 = vadd.f32 %v2547, %v2548
    %v2550 = vrot.slane %v2549, 1
    %v2551 = vadd.f32 %v2549, %v2550
    %v2552 = vrot.slane %v2442, 4
    %v2553 = vadd.f32 %v2442, %v2552
    %v2554 = vrot.slane %v2553, 2
    %v2555 = vadd.f32 %v2553, %v2554
    %v2556 = vrot.slane %v2555, 1
    %v2557 = vadd.f32 %v2555, %v2556
    %v2558 = vrot.slane %v2443, 4
    %v2559 = vadd.f32 %v2443, %v2558
    %v2560 = vrot.slane %v2559, 2
    %v2561 = vadd.f32 %v2559, %v2560
    %v2562 = vrot.slane %v2561, 1
    %v2563 = vadd.f32 %v2561, %v2562
    %v2564 = vrot.slane %v2444, 4
    %v2565 = vadd.f32 %v2444, %v2564
    %v2566 = vrot.slane %v2565, 2
    %v2567 = vadd.f32 %v2565, %v2566
    %v2568 = vrot.slane %v2567, 1
    %v2569 = vadd.f32 %v2567, %v2568
    %v2570 = vrot.slane %v2445, 4
    %v2571 = vadd.f32 %v2445, %v2570
    %v2572 = vrot.slane %v2571, 2
    %v2573 = vadd.f32 %v2571, %v2572
    %v2574 = vrot.slane %v2573, 1
    %v2575 = vadd.f32 %v2573, %v2574
    %v2576 = vrot.slane %v2446, 4
    %v2577 = vadd.f32 %v2446, %v2576
    %v2578 = vrot.slane %v2577, 2
    %v2579 = vadd.f32 %v2577, %v2578
    %v2580 = vrot.slane %v2579, 1
    %v2581 = vadd.f32 %v2579, %v2580
    %v2582 = vrot.slane %v2447, 4
    %v2583 = vadd.f32 %v2447, %v2582
    %v2584 = vrot.slane %v2583, 2
    %v2585 = vadd.f32 %v2583, %v2584
    %v2586 = vrot.slane %v2585, 1
    %v2587 = vadd.f32 %v2585, %v2586
    %v2588 = vrot.slane %v2448, 4
    %v2589 = vadd.f32 %v2448, %v2588
    %v2590 = vrot.slane %v2589, 2
    %v2591 = vadd.f32 %v2589, %v2590
    %v2592 = vrot.slane %v2591, 1
    %v2593 = vadd.f32 %v2591, %v2592
    %v2594 = vrot.slane %v2449, 4
    %v2595 = vadd.f32 %v2449, %v2594
    %v2596 = vrot.slane %v2595, 2
    %v2597 = vadd.f32 %v2595, %v2596
    %v2598 = vrot.slane %v2597, 1
    %v2599 = vadd.f32 %v2597, %v2598
    %v2600 = vrot.slane %v2450, 4
    %v2601 = vadd.f32 %v2450, %v2600
    %v2602 = vrot.slane %v2601, 2
    %v2603 = vadd.f32 %v2601, %v2602
    %v2604 = vrot.slane %v2603, 1
    %v2605 = vadd.f32 %v2603, %v2604
    %vm2606 = vcmask 556032
    %v2607 = vsel %vm2606, %v2451, 0.0
    %v2608 = vrot.slane %v2607, 4
    %v2609 = vadd.f32 %v2607, %v2608
    %v2610 = vrot.slane %v2609, 2
    %v2611 = vadd.f32 %v2609, %v2610
    %v2612 = vrot.slane %v2611, 1
    %v2613 = vadd.f32 %v2611, %v2612
    %v2634 = vcombine.low %v2497, %v2503
    %v2635 = vcombine.low %v2509, %v2515
    %v2636 = vcombine.low %v2521, %v2527
    %v2637 = vcombine.low %v2533, %v2539
    %v2639 = vunpack.c.l.s4 1966171168
    %v2640 = vunpack.c.0.s8 %v2639
    %v2641 = vlaneseq
    %v2642 = vshrl.u32 %v2641, 7
    %v2643 = vsub.s32 %v2640, %v2642
    %v2644 = vrot.slane %v2634, %v2643
    %v2646 = vunpack.c.l.s4 1966171168
    %v2647 = vunpack.c.0.s8 %v2646
    %v2648 = vlaneseq
    %v2649 = vshrl.u32 %v2648, 7
    %v2650 = vsub.s32 %v2647, %v2649
    %v2651 = vrot.slane %v2635, %v2650
    %v2653 = vunpack.c.l.s4 1966171168
    %v2654 = vunpack.c.0.s8 %v2653
    %v2655 = vlaneseq
    %v2656 = vshrl.u32 %v2655, 7
    %v2657 = vsub.s32 %v2654, %v2656
    %v2658 = vrot.slane %v2636, %v2657
    %v2660 = vunpack.c.l.s4 1966171168
    %v2661 = vunpack.c.0.s8 %v2660
    %v2662 = vlaneseq
    %v2663 = vshrl.u32 %v2662, 7
    %v2664 = vsub.s32 %v2661, %v2663
    %v2665 = vrot.slane %v2637, %v2664
    %v2666 = vcombine.low %v2644, %v2651
    %v2667 = vcombine.low %v2658, %v2665
    %v2669 = vunpack.c.l.s4 1966171168
    %v2670 = vunpack.c.0.s8 %v2669
    %v2671 = vlaneseq
    %v2672 = vshrl.u32 %v2671, 7
    %v2673 = vsub.s32 %v2670, %v2672
    %v2674 = vrot.slane %v2666, %v2673
    %v2676 = vunpack.c.l.s4 1966171168
    %v2677 = vunpack.c.0.s8 %v2676
    %v2678 = vlaneseq
    %v2679 = vshrl.u32 %v2678, 7
    %v2680 = vsub.s32 %v2677, %v2679
    %v2681 = vrot.slane %v2667, %v2680
    %v2682 = vcombine.low %v2674, %v2681
    %v2683 = vcombine.low %v2545, %v2551
    %v2684 = vcombine.low %v2557, %v2563
    %v2685 = vcombine.low %v2569, %v2575
    %v2686 = vcombine.low %v2581, %v2587
    %v2688 = vunpack.c.l.s4 1966171168
    %v2689 = vunpack.c.0.s8 %v2688
    %v2690 = vlaneseq
    %v2691 = vshrl.u32 %v2690, 7
    %v2692 = vsub.s32 %v2689, %v2691
    %v2693 = vrot.slane %v2683, %v2692
    %v2695 = vunpack.c.l.s4 1966171168
    %v2696 = vunpack.c.0.s8 %v2695
    %v2697 = vlaneseq
    %v2698 = vshrl.u32 %v2697, 7
    %v2699 = vsub.s32 %v2696, %v2698
    %v2700 = vrot.slane %v2684, %v2699
    %v2702 = vunpack.c.l.s4 1966171168
    %v2703 = vunpack.c.0.s8 %v2702
    %v2704 = vlaneseq
    %v2705 = vshrl.u32 %v2704, 7
    %v2706 = vsub.s32 %v2703, %v2705
    %v2707 = vrot.slane %v2685, %v2706
    %v2709 = vunpack.c.l.s4 1966171168
    %v2710 = vunpack.c.0.s8 %v2709
    %v2711 = vlaneseq
    %v2712 = vshrl.u32 %v2711, 7
    %v2713 = vsub.s32 %v2710, %v2712
    %v2714 = vrot.slane %v2686, %v2713
    %v2715 = vcombine.low %v2693, %v2700
    %v2716 = vcombine.low %v2707, %v2714
    %v2718 = vunpack.c.l.s4 1966171168
    %v2719 = vunpack.c.0.s8 %v2718
    %v2720 = vlaneseq
    %v2721 = vshrl.u32 %v2720, 7
    %v2722 = vsub.s32 %v2719, %v2721
    %v2723 = vrot.slane %v2715, %v2722
    %v2725 = vunpack.c.l.s4 1966171168
    %v2726 = vunpack.c.0.s8 %v2725
    %v2727 = vlaneseq
    %v2728 = vshrl.u32 %v2727, 7
    %v2729 = vsub.s32 %v2726, %v2728
    %v2730 = vrot.slane %v2716, %v2729
    %v2731 = vcombine.low %v2723, %v2730
    %v2732 = vcombine.low %v2593, %v2599
    %v2733 = vcombine.low %v2605, %v2613
    %v2735 = vunpack.c.l.s4 1966171168
    %v2736 = vunpack.c.0.s8 %v2735
    %v2737 = vlaneseq
    %v2738 = vshrl.u32 %v2737, 7
    %v2739 = vsub.s32 %v2736, %v2738
    %v2740 = vrot.slane %v2732, %v2739
    %v2742 = vunpack.c.l.s4 1966171168
    %v2743 = vunpack.c.0.s8 %v2742
    %v2744 = vlaneseq
    %v2745 = vshrl.u32 %v2744, 7
    %v2746 = vsub.s32 %v2743, %v2745
    %v2747 = vrot.slane %v2733, %v2746
    %v2748 = vcombine.low %v2740, %v2747
    %v2750 = vunpack.c.l.s4 1966171168
    %v2751 = vunpack.c.0.s8 %v2750
    %v2752 = vlaneseq
    %v2753 = vshrl.u32 %v2752, 7
    %v2754 = vsub.s32 %v2751, %v2753
    %v2755 = vrot.slane %v2748, %v2754
    %2759 = vst [vmem:[#allocation7] sm:$0xff] %v2682
    %2760 = vst [vmem:[#allocation7 + $0x8] sm:$0xff] %v2731
    %v2761 = vlaneseq
    %vm2762 = vcmp.ge.s32.totalorder %v2761, 0
    %vm2763 = vcmp.lt.s32.totalorder %v2761, 452
    %vm2764 = vmand %vm2762, %vm2763
    %2765 = vst.msk [vmem:[#allocation7 + $0x10] sm:$0xf] %vm2764, %v2755
    %v2766 = vrot.slane %v2452, 4
    %v2767 = vmin.f32 %v2452, %v2766
    %v2768 = vrot.slane %v2767, 2
    %v2769 = vmin.f32 %v2767, %v2768
    %v2770 = vrot.slane %v2769, 1
    %v2771 = vmin.f32 %v2769, %v2770
    %v2772 = vrot.slane %v2453, 4
    %v2773 = vmin.f32 %v2453, %v2772
    %v2774 = vrot.slane %v2773, 2
    %v2775 = vmin.f32 %v2773, %v2774
    %v2776 = vrot.slane %v2775, 1
    %v2777 = vmin.f32 %v2775, %v2776
    %v2778 = vrot.slane %v2454, 4
    %v2779 = vmin.f32 %v2454, %v2778
    %v2780 = vrot.slane %v2779, 2
    %v2781 = vmin.f32 %v2779, %v2780
    %v2782 = vrot.slane %v2781, 1
    %v2783 = vmin.f32 %v2781, %v2782
    %v2784 = vrot.slane %v2455, 4
    %v2785 = vmin.f32 %v2455, %v2784
    %v2786 = vrot.slane %v2785, 2
    %v2787 = vmin.f32 %v2785, %v2786
    %v2788 = vrot.slane %v2787, 1
    %v2789 = vmin.f32 %v2787, %v2788
    %v2790 = vrot.slane %v2456, 4
    %v2791 = vmin.f32 %v2456, %v2790
    %v2792 = vrot.slane %v2791, 2
    %v2793 = vmin.f32 %v2791, %v2792
    %v2794 = vrot.slane %v2793, 1
    %v2795 = vmin.f32 %v2793, %v2794
    %v2796 = vrot.slane %v2457, 4
    %v2797 = vmin.f32 %v2457, %v2796
    %v2798 = vrot.slane %v2797, 2
    %v2799 = vmin.f32 %v2797, %v2798
    %v2800 = vrot.slane %v2799, 1
    %v2801 = vmin.f32 %v2799, %v2800
    %v2802 = vrot.slane %v2458, 4
    %v2803 = vmin.f32 %v2458, %v2802
    %v2804 = vrot.slane %v2803, 2
    %v2805 = vmin.f32 %v2803, %v2804
    %v2806 = vrot.slane %v2805, 1
    %v2807 = vmin.f32 %v2805, %v2806
    %v2808 = vrot.slane %v2459, 4
    %v2809 = vmin.f32 %v2459, %v2808
    %v2810 = vrot.slane %v2809, 2
    %v2811 = vmin.f32 %v2809, %v2810
    %v2812 = vrot.slane %v2811, 1
    %v2813 = vmin.f32 %v2811, %v2812
    %v2814 = vrot.slane %v2460, 4
    %v2815 = vmin.f32 %v2460, %v2814
    %v2816 = vrot.slane %v2815, 2
    %v2817 = vmin.f32 %v2815, %v2816
    %v2818 = vrot.slane %v2817, 1
    %v2819 = vmin.f32 %v2817, %v2818
    %v2820 = vrot.slane %v2461, 4
    %v2821 = vmin.f32 %v2461, %v2820
    %v2822 = vrot.slane %v2821, 2
    %v2823 = vmin.f32 %v2821, %v2822
    %v2824 = vrot.slane %v2823, 1
    %v2825 = vmin.f32 %v2823, %v2824
    %v2826 = vrot.slane %v2462, 4
    %v2827 = vmin.f32 %v2462, %v2826
    %v2828 = vrot.slane %v2827, 2
    %v2829 = vmin.f32 %v2827, %v2828
    %v2830 = vrot.slane %v2829, 1
    %v2831 = vmin.f32 %v2829, %v2830
    %v2832 = vrot.slane %v2463, 4
    %v2833 = vmin.f32 %v2463, %v2832
    %v2834 = vrot.slane %v2833, 2
    %v2835 = vmin.f32 %v2833, %v2834
    %v2836 = vrot.slane %v2835, 1
    %v2837 = vmin.f32 %v2835, %v2836
    %v2838 = vrot.slane %v2464, 4
    %v2839 = vmin.f32 %v2464, %v2838
    %v2840 = vrot.slane %v2839, 2
    %v2841 = vmin.f32 %v2839, %v2840
    %v2842 = vrot.slane %v2841, 1
    %v2843 = vmin.f32 %v2841, %v2842
    %v2844 = vrot.slane %v2465, 4
    %v2845 = vmin.f32 %v2465, %v2844
    %v2846 = vrot.slane %v2845, 2
    %v2847 = vmin.f32 %v2845, %v2846
    %v2848 = vrot.slane %v2847, 1
    %v2849 = vmin.f32 %v2847, %v2848
    %v2850 = vrot.slane %v2466, 4
    %v2851 = vmin.f32 %v2466, %v2850
    %v2852 = vrot.slane %v2851, 2
    %v2853 = vmin.f32 %v2851, %v2852
    %v2854 = vrot.slane %v2853, 1
    %v2855 = vmin.f32 %v2853, %v2854
    %v2856 = vrot.slane %v2467, 4
    %v2857 = vmin.f32 %v2467, %v2856
    %v2858 = vrot.slane %v2857, 2
    %v2859 = vmin.f32 %v2857, %v2858
    %v2860 = vrot.slane %v2859, 1
    %v2861 = vmin.f32 %v2859, %v2860
    %v2862 = vrot.slane %v2468, 4
    %v2863 = vmin.f32 %v2468, %v2862
    %v2864 = vrot.slane %v2863, 2
    %v2865 = vmin.f32 %v2863, %v2864
    %v2866 = vrot.slane %v2865, 1
    %v2867 = vmin.f32 %v2865, %v2866
    %v2868 = vrot.slane %v2469, 4
    %v2869 = vmin.f32 %v2469, %v2868
    %v2870 = vrot.slane %v2869, 2
    %v2871 = vmin.f32 %v2869, %v2870
    %v2872 = vrot.slane %v2871, 1
    %v2873 = vmin.f32 %v2871, %v2872
    %v2874 = vrot.slane %v2470, 4
    %v2875 = vmin.f32 %v2470, %v2874
    %v2876 = vrot.slane %v2875, 2
    %v2877 = vmin.f32 %v2875, %v2876
    %v2878 = vrot.slane %v2877, 1
    %v2879 = vmin.f32 %v2877, %v2878
    %v2880 = vsel %vm2606, %v2471, inf
    %v2881 = vrot.slane %v2880, 4
    %v2882 = vmin.f32 %v2880, %v2881
    %v2883 = vrot.slane %v2882, 2
    %v2884 = vmin.f32 %v2882, %v2883
    %v2885 = vrot.slane %v2884, 1
    %v2886 = vmin.f32 %v2884, %v2885
    %v2907 = vcombine.low %v2771, %v2777
    %v2908 = vcombine.low %v2783, %v2789
    %v2909 = vcombine.low %v2795, %v2801
    %v2910 = vcombine.low %v2807, %v2813
    %v2912 = vunpack.c.l.s4 1966171168
    %v2913 = vunpack.c.0.s8 %v2912
    %v2914 = vlaneseq
    %v2915 = vshrl.u32 %v2914, 7
    %v2916 = vsub.s32 %v2913, %v2915
    %v2917 = vrot.slane %v2907, %v2916
    %v2919 = vunpack.c.l.s4 1966171168
    %v2920 = vunpack.c.0.s8 %v2919
    %v2921 = vlaneseq
    %v2922 = vshrl.u32 %v2921, 7
    %v2923 = vsub.s32 %v2920, %v2922
    %v2924 = vrot.slane %v2908, %v2923
    %v2926 = vunpack.c.l.s4 1966171168
    %v2927 = vunpack.c.0.s8 %v2926
    %v2928 = vlaneseq
    %v2929 = vshrl.u32 %v2928, 7
    %v2930 = vsub.s32 %v2927, %v2929
    %v2931 = vrot.slane %v2909, %v2930
    %v2933 = vunpack.c.l.s4 1966171168
    %v2934 = vunpack.c.0.s8 %v2933
    %v2935 = vlaneseq
    %v2936 = vshrl.u32 %v2935, 7
    %v2937 = vsub.s32 %v2934, %v2936
    %v2938 = vrot.slane %v2910, %v2937
    %v2939 = vcombine.low %v2917, %v2924
    %v2940 = vcombine.low %v2931, %v2938
    %v2942 = vunpack.c.l.s4 1966171168
    %v2943 = vunpack.c.0.s8 %v2942
    %v2944 = vlaneseq
    %v2945 = vshrl.u32 %v2944, 7
    %v2946 = vsub.s32 %v2943, %v2945
    %v2947 = vrot.slane %v2939, %v2946
    %v2949 = vunpack.c.l.s4 1966171168
    %v2950 = vunpack.c.0.s8 %v2949
    %v2951 = vlaneseq
    %v2952 = vshrl.u32 %v2951, 7
    %v2953 = vsub.s32 %v2950, %v2952
    %v2954 = vrot.slane %v2940, %v2953
    %v2955 = vcombine.low %v2947, %v2954
    %v2956 = vcombine.low %v2819, %v2825
    %v2957 = vcombine.low %v2831, %v2837
    %v2958 = vcombine.low %v2843, %v2849
    %v2959 = vcombine.low %v2855, %v2861
    %v2961 = vunpack.c.l.s4 1966171168
    %v2962 = vunpack.c.0.s8 %v2961
    %v2963 = vlaneseq
    %v2964 = vshrl.u32 %v2963, 7
    %v2965 = vsub.s32 %v2962, %v2964
    %v2966 = vrot.slane %v2956, %v2965
    %v2968 = vunpack.c.l.s4 1966171168
    %v2969 = vunpack.c.0.s8 %v2968
    %v2970 = vlaneseq
    %v2971 = vshrl.u32 %v2970, 7
    %v2972 = vsub.s32 %v2969, %v2971
    %v2973 = vrot.slane %v2957, %v2972
    %v2975 = vunpack.c.l.s4 1966171168
    %v2976 = vunpack.c.0.s8 %v2975
    %v2977 = vlaneseq
    %v2978 = vshrl.u32 %v2977, 7
    %v2979 = vsub.s32 %v2976, %v2978
    %v2980 = vrot.slane %v2958, %v2979
    %v2982 = vunpack.c.l.s4 1966171168
    %v2983 = vunpack.c.0.s8 %v2982
    %v2984 = vlaneseq
    %v2985 = vshrl.u32 %v2984, 7
    %v2986 = vsub.s32 %v2983, %v2985
    %v2987 = vrot.slane %v2959, %v2986
    %v2988 = vcombine.low %v2966, %v2973
    %v2989 = vcombine.low %v2980, %v2987
    %v2991 = vunpack.c.l.s4 1966171168
    %v2992 = vunpack.c.0.s8 %v2991
    %v2993 = vlaneseq
    %v2994 = vshrl.u32 %v2993, 7
    %v2995 = vsub.s32 %v2992, %v2994
    %v2996 = vrot.slane %v2988, %v2995
    %v2998 = vunpack.c.l.s4 1966171168
    %v2999 = vunpack.c.0.s8 %v2998
    %v3000 = vlaneseq
    %v3001 = vshrl.u32 %v3000, 7
    %v3002 = vsub.s32 %v2999, %v3001
    %v3003 = vrot.slane %v2989, %v3002
    %v3004 = vcombine.low %v2996, %v3003
    %v3005 = vcombine.low %v2867, %v2873
    %v3006 = vcombine.low %v2879, %v2886
    %v3008 = vunpack.c.l.s4 1966171168
    %v3009 = vunpack.c.0.s8 %v3008
    %v3010 = vlaneseq
    %v3011 = vshrl.u32 %v3010, 7
    %v3012 = vsub.s32 %v3009, %v3011
    %v3013 = vrot.slane %v3005, %v3012
    %v3015 = vunpack.c.l.s4 1966171168
    %v3016 = vunpack.c.0.s8 %v3015
    %v3017 = vlaneseq
    %v3018 = vshrl.u32 %v3017, 7
    %v3019 = vsub.s32 %v3016, %v3018
    %v3020 = vrot.slane %v3006, %v3019
    %v3021 = vcombine.low %v3013, %v3020
    %v3023 = vunpack.c.l.s4 1966171168
    %v3024 = vunpack.c.0.s8 %v3023
    %v3025 = vlaneseq
    %v3026 = vshrl.u32 %v3025, 7
    %v3027 = vsub.s32 %v3024, %v3026
    %v3028 = vrot.slane %v3021, %v3027
    %3032 = vst [vmem:[#allocation8] sm:$0xff] %v2955
    %3033 = vst [vmem:[#allocation8 + $0x8] sm:$0xff] %v3004
    %3034 = vst.msk [vmem:[#allocation8 + $0x10] sm:$0xf] %vm2764, %v3028
    %v3035 = vrot.slane %v2472, 4
    %v3036 = vmax.f32 %v2472, %v3035
    %v3037 = vrot.slane %v3036, 2
    %v3038 = vmax.f32 %v3036, %v3037
    %v3039 = vrot.slane %v3038, 1
    %v3040 = vmax.f32 %v3038, %v3039
    %v3041 = vrot.slane %v2473, 4
    %v3042 = vmax.f32 %v2473, %v3041
    %v3043 = vrot.slane %v3042, 2
    %v3044 = vmax.f32 %v3042, %v3043
    %v3045 = vrot.slane %v3044, 1
    %v3046 = vmax.f32 %v3044, %v3045
    %v3047 = vrot.slane %v2474, 4
    %v3048 = vmax.f32 %v2474, %v3047
    %v3049 = vrot.slane %v3048, 2
    %v3050 = vmax.f32 %v3048, %v3049
    %v3051 = vrot.slane %v3050, 1
    %v3052 = vmax.f32 %v3050, %v3051
    %v3053 = vrot.slane %v2475, 4
    %v3054 = vmax.f32 %v2475, %v3053
    %v3055 = vrot.slane %v3054, 2
    %v3056 = vmax.f32 %v3054, %v3055
    %v3057 = vrot.slane %v3056, 1
    %v3058 = vmax.f32 %v3056, %v3057
    %v3059 = vrot.slane %v2476, 4
    %v3060 = vmax.f32 %v2476, %v3059
    %v3061 = vrot.slane %v3060, 2
    %v3062 = vmax.f32 %v3060, %v3061
    %v3063 = vrot.slane %v3062, 1
    %v3064 = vmax.f32 %v3062, %v3063
    %v3065 = vrot.slane %v2477, 4
    %v3066 = vmax.f32 %v2477, %v3065
    %v3067 = vrot.slane %v3066, 2
    %v3068 = vmax.f32 %v3066, %v3067
    %v3069 = vrot.slane %v3068, 1
    %v3070 = vmax.f32 %v3068, %v3069
    %v3071 = vrot.slane %v2478, 4
    %v3072 = vmax.f32 %v2478, %v3071
    %v3073 = vrot.slane %v3072, 2
    %v3074 = vmax.f32 %v3072, %v3073
    %v3075 = vrot.slane %v3074, 1
    %v3076 = vmax.f32 %v3074, %v3075
    %v3077 = vrot.slane %v2479, 4
    %v3078 = vmax.f32 %v2479, %v3077
    %v3079 = vrot.slane %v3078, 2
    %v3080 = vmax.f32 %v3078, %v3079
    %v3081 = vrot.slane %v3080, 1
    %v3082 = vmax.f32 %v3080, %v3081
    %v3083 = vrot.slane %v2480, 4
    %v3084 = vmax.f32 %v2480, %v3083
    %v3085 = vrot.slane %v3084, 2
    %v3086 = vmax.f32 %v3084, %v3085
    %v3087 = vrot.slane %v3086, 1
    %v3088 = vmax.f32 %v3086, %v3087
    %v3089 = vrot.slane %v2481, 4
    %v3090 = vmax.f32 %v2481, %v3089
    %v3091 = vrot.slane %v3090, 2
    %v3092 = vmax.f32 %v3090, %v3091
    %v3093 = vrot.slane %v3092, 1
    %v3094 = vmax.f32 %v3092, %v3093
    %v3095 = vrot.slane %v2482, 4
    %v3096 = vmax.f32 %v2482, %v3095
    %v3097 = vrot.slane %v3096, 2
    %v3098 = vmax.f32 %v3096, %v3097
    %v3099 = vrot.slane %v3098, 1
    %v3100 = vmax.f32 %v3098, %v3099
    %v3101 = vrot.slane %v2483, 4
    %v3102 = vmax.f32 %v2483, %v3101
    %v3103 = vrot.slane %v3102, 2
    %v3104 = vmax.f32 %v3102, %v3103
    %v3105 = vrot.slane %v3104, 1
    %v3106 = vmax.f32 %v3104, %v3105
    %v3107 = vrot.slane %v2484, 4
    %v3108 = vmax.f32 %v2484, %v3107
    %v3109 = vrot.slane %v3108, 2
    %v3110 = vmax.f32 %v3108, %v3109
    %v3111 = vrot.slane %v3110, 1
    %v3112 = vmax.f32 %v3110, %v3111
    %v3113 = vrot.slane %v2485, 4
    %v3114 = vmax.f32 %v2485, %v3113
    %v3115 = vrot.slane %v3114, 2
    %v3116 = vmax.f32 %v3114, %v3115
    %v3117 = vrot.slane %v3116, 1
    %v3118 = vmax.f32 %v3116, %v3117
    %v3119 = vrot.slane %v2486, 4
    %v3120 = vmax.f32 %v2486, %v3119
    %v3121 = vrot.slane %v3120, 2
    %v3122 = vmax.f32 %v3120, %v3121
    %v3123 = vrot.slane %v3122, 1
    %v3124 = vmax.f32 %v3122, %v3123
    %v3125 = vrot.slane %v2487, 4
    %v3126 = vmax.f32 %v2487, %v3125
    %v3127 = vrot.slane %v3126, 2
    %v3128 = vmax.f32 %v3126, %v3127
    %v3129 = vrot.slane %v3128, 1
    %v3130 = vmax.f32 %v3128, %v3129
    %v3131 = vrot.slane %v2488, 4
    %v3132 = vmax.f32 %v2488, %v3131
    %v3133 = vrot.slane %v3132, 2
    %v3134 = vmax.f32 %v3132, %v3133
    %v3135 = vrot.slane %v3134, 1
    %v3136 = vmax.f32 %v3134, %v3135
    %v3137 = vrot.slane %v2489, 4
    %v3138 = vmax.f32 %v2489, %v3137
    %v3139 = vrot.slane %v3138, 2
    %v3140 = vmax.f32 %v3138, %v3139
    %v3141 = vrot.slane %v3140, 1
    %v3142 = vmax.f32 %v3140, %v3141
    %v3143 = vrot.slane %v2490, 4
    %v3144 = vmax.f32 %v2490, %v3143
    %v3145 = vrot.slane %v3144, 2
    %v3146 = vmax.f32 %v3144, %v3145
    %v3147 = vrot.slane %v3146, 1
    %v3148 = vmax.f32 %v3146, %v3147
    %v3149 = vsel %vm2606, %v2491, -inf
    %v3150 = vrot.slane %v3149, 4
    %v3151 = vmax.f32 %v3149, %v3150
    %v3152 = vrot.slane %v3151, 2
    %v3153 = vmax.f32 %v3151, %v3152
    %v3154 = vrot.slane %v3153, 1
    %v3155 = vmax.f32 %v3153, %v3154
    %v3176 = vcombine.low %v3040, %v3046
    %v3177 = vcombine.low %v3052, %v3058
    %v3178 = vcombine.low %v3064, %v3070
    %v3179 = vcombine.low %v3076, %v3082
    %v3181 = vunpack.c.l.s4 1966171168
    %v3182 = vunpack.c.0.s8 %v3181
    %v3183 = vlaneseq
    %v3184 = vshrl.u32 %v3183, 7
    %v3185 = vsub.s32 %v3182, %v3184
    %v3186 = vrot.slane %v3176, %v3185
    %v3188 = vunpack.c.l.s4 1966171168
    %v3189 = vunpack.c.0.s8 %v3188
    %v3190 = vlaneseq
    %v3191 = vshrl.u32 %v3190, 7
    %v3192 = vsub.s32 %v3189, %v3191
    %v3193 = vrot.slane %v3177, %v3192
    %v3195 = vunpack.c.l.s4 1966171168
    %v3196 = vunpack.c.0.s8 %v3195
    %v3197 = vlaneseq
    %v3198 = vshrl.u32 %v3197, 7
    %v3199 = vsub.s32 %v3196, %v3198
    %v3200 = vrot.slane %v3178, %v3199
    %v3202 = vunpack.c.l.s4 1966171168
    %v3203 = vunpack.c.0.s8 %v3202
    %v3204 = vlaneseq
    %v3205 = vshrl.u32 %v3204, 7
    %v3206 = vsub.s32 %v3203, %v3205
    %v3207 = vrot.slane %v3179, %v3206
    %v3208 = vcombine.low %v3186, %v3193
    %v3209 = vcombine.low %v3200, %v3207
    %v3211 = vunpack.c.l.s4 1966171168
    %v3212 = vunpack.c.0.s8 %v3211
    %v3213 = vlaneseq
    %v3214 = vshrl.u32 %v3213, 7
    %v3215 = vsub.s32 %v3212, %v3214
    %v3216 = vrot.slane %v3208, %v3215
    %v3218 = vunpack.c.l.s4 1966171168
    %v3219 = vunpack.c.0.s8 %v3218
    %v3220 = vlaneseq
    %v3221 = vshrl.u32 %v3220, 7
    %v3222 = vsub.s32 %v3219, %v3221
    %v3223 = vrot.slane %v3209, %v3222
    %v3224 = vcombine.low %v3216, %v3223
    %v3225 = vcombine.low %v3088, %v3094
    %v3226 = vcombine.low %v3100, %v3106
    %v3227 = vcombine.low %v3112, %v3118
    %v3228 = vcombine.low %v3124, %v3130
    %v3230 = vunpack.c.l.s4 1966171168
    %v3231 = vunpack.c.0.s8 %v3230
    %v3232 = vlaneseq
    %v3233 = vshrl.u32 %v3232, 7
    %v3234 = vsub.s32 %v3231, %v3233
    %v3235 = vrot.slane %v3225, %v3234
    %v3237 = vunpack.c.l.s4 1966171168
    %v3238 = vunpack.c.0.s8 %v3237
    %v3239 = vlaneseq
    %v3240 = vshrl.u32 %v3239, 7
    %v3241 = vsub.s32 %v3238, %v3240
    %v3242 = vrot.slane %v3226, %v3241
    %v3244 = vunpack.c.l.s4 1966171168
    %v3245 = vunpack.c.0.s8 %v3244
    %v3246 = vlaneseq
    %v3247 = vshrl.u32 %v3246, 7
    %v3248 = vsub.s32 %v3245, %v3247
    %v3249 = vrot.slane %v3227, %v3248
    %v3251 = vunpack.c.l.s4 1966171168
    %v3252 = vunpack.c.0.s8 %v3251
    %v3253 = vlaneseq
    %v3254 = vshrl.u32 %v3253, 7
    %v3255 = vsub.s32 %v3252, %v3254
    %v3256 = vrot.slane %v3228, %v3255
    %v3257 = vcombine.low %v3235, %v3242
    %v3258 = vcombine.low %v3249, %v3256
    %v3260 = vunpack.c.l.s4 1966171168
    %v3261 = vunpack.c.0.s8 %v3260
    %v3262 = vlaneseq
    %v3263 = vshrl.u32 %v3262, 7
    %v3264 = vsub.s32 %v3261, %v3263
    %v3265 = vrot.slane %v3257, %v3264
    %v3267 = vunpack.c.l.s4 1966171168
    %v3268 = vunpack.c.0.s8 %v3267
    %v3269 = vlaneseq
    %v3270 = vshrl.u32 %v3269, 7
    %v3271 = vsub.s32 %v3268, %v3270
    %v3272 = vrot.slane %v3258, %v3271
    %v3273 = vcombine.low %v3265, %v3272
    %v3274 = vcombine.low %v3136, %v3142
    %v3275 = vcombine.low %v3148, %v3155
    %v3277 = vunpack.c.l.s4 1966171168
    %v3278 = vunpack.c.0.s8 %v3277
    %v3279 = vlaneseq
    %v3280 = vshrl.u32 %v3279, 7
    %v3281 = vsub.s32 %v3278, %v3280
    %v3282 = vrot.slane %v3274, %v3281
    %v3284 = vunpack.c.l.s4 1966171168
    %v3285 = vunpack.c.0.s8 %v3284
    %v3286 = vlaneseq
    %v3287 = vshrl.u32 %v3286, 7
    %v3288 = vsub.s32 %v3285, %v3287
    %v3289 = vrot.slane %v3275, %v3288
    %v3290 = vcombine.low %v3282, %v3289
    %v3292 = vunpack.c.l.s4 1966171168
    %v3293 = vunpack.c.0.s8 %v3292
    %v3294 = vlaneseq
    %v3295 = vshrl.u32 %v3294, 7
    %v3296 = vsub.s32 %v3293, %v3295
    %v3297 = vrot.slane %v3290, %v3296
    %3301 = vst [vmem:[#allocation10] sm:$0xff] %v3224
    %3302 = vst [vmem:[#allocation10 + $0x8] sm:$0xff] %v3273
    %3303 = vst.msk [vmem:[#allocation10 + $0x10] sm:$0xf] %vm2764, %v3297
    // Predicated region
    $region18: #{tpu_custom_call.1} parent=1 // pred_check
      _
    $region19: #{tpu_custom_call.1} parent=1 // pred_check_branch
      %3305 = sbr.rel (0) target = $region21
    $region20: #{tpu_custom_call.1} parent=1 // pred_region
      %s3307 = ssub.s32 320, 320
      %3308 = vsyncadd [#allocation4], %s3307
      %s3310 = sshll.u32 [#allocation7], 4
      %s3311 = int_to_ptr.vmem [resolvable:$true] %s3310
      %3313 = dma.vmem_to_hbm [thread:$0]  %s3311, 320, %s2, [#allocation4]
    $region21: #{tpu_custom_call.1} parent=1 // pred_fallthru
      _
    // Predicated region
    $region22: #{tpu_custom_call.1} parent=1 // pred_check
      _
    $region23: #{tpu_custom_call.1} parent=1 // pred_check_branch
      %3315 = sbr.rel (0) target = $region25
    $region24: #{tpu_custom_call.1} parent=1 // pred_region
      %s3317 = ssub.s32 320, 320
      %3318 = vsyncadd [#allocation9], %s3317
      %s3320 = sshll.u32 [#allocation8], 4
      %s3321 = int_to_ptr.vmem [resolvable:$true] %s3320
      %3323 = dma.vmem_to_hbm [thread:$0]  %s3321, 320, %s3, [#allocation9]
    $region25: #{tpu_custom_call.1} parent=1 // pred_fallthru
      _
    // Predicated region
    $region26: #{tpu_custom_call.1} parent=1 // pred_check
      _
    $region27: #{tpu_custom_call.1} parent=1 // pred_check_branch
      %3325 = sbr.rel (0) target = $region29
    $region28: #{tpu_custom_call.1} parent=1 // pred_region
      %s3327 = ssub.s32 320, 320
      %3328 = vsyncadd [#allocation9], %s3327
      %s3330 = sshll.u32 [#allocation10], 4
      %s3331 = int_to_ptr.vmem [resolvable:$true] %s3330
      %3333 = dma.vmem_to_hbm [thread:$0]  %s3331, 320, %s4, [#allocation9]
    $region29: #{tpu_custom_call.1} parent=1 // pred_fallthru
      _
    // Predicated region
    $region30: #{tpu_custom_call.1} parent=1 // pred_check
      _
    $region31: #{tpu_custom_call.1} parent=1 // pred_check_branch
      %3335 = sbr.rel (0) target = $region33
    $region32: #{tpu_custom_call.1} parent=1 // pred_region
      %3336 = dma.done [#allocation4], 320
    $region33: #{tpu_custom_call.1} parent=1 // pred_fallthru
      _
    // Predicated region
    $region34: #{tpu_custom_call.1} parent=1 // pred_check
      _
    $region35: #{tpu_custom_call.1} parent=1 // pred_check_branch
      %3338 = sbr.rel (0) target = $region37
    $region36: #{tpu_custom_call.1} parent=1 // pred_region
      %3339 = dma.done [#allocation9], 320
    $region37: #{tpu_custom_call.1} parent=1 // pred_fallthru
      _
    // Predicated region
    $region38: #{tpu_custom_call.1} parent=1 // pred_check
      _
    $region39: #{tpu_custom_call.1} parent=1 // pred_check_branch
      %3341 = sbr.rel (0) target = $region41
    $region40: #{tpu_custom_call.1} parent=1 // pred_region
      %3342 = dma.done [#allocation9], 320
    $region41: #{tpu_custom_call.1} parent=1 // pred_fallthru
      _
    %3343 = vsyncpa [#allocation3], 1
    %3344 = vsyncpa [#allocation6], 1
    %3345 = vsyncpa [#allocation4], 1
    %3346 = vsyncpa [#allocation9], 1

</llo_original>
